<compile_context>
chip_gen: v5e
topology: v5e:2x2
jax: 0.10.0
libtpu: 0.0.40
codegen_flags: <defaults>
</compile_context>

<pallas_src>
import functools

import jax
import jax.numpy as jnp
from jax.experimental import pallas as pl
from jax.experimental.pallas import tpu as pltpu


def _upsample_concat_kernel(x_ref, r_ref, w_ref, b_ref, d_ref, o_ref, *,
                            c_out, th, w_in):
    # x_ref: (1, C_in,  TH, W)      input rows at original resolution
    # r_ref: (1, C_r,   TH, 4W)     skip connection, packed (row 2h | row 2h+1)
    # w_ref: (C_out, C_in)          1x1 conv weight
    # b_ref: (C_out, 1)             bias (broadcast over lanes)
    # d_ref: (W, 2W)                nearest-neighbour column-doubling matrix
    # o_ref: (1, C_out + C_r, TH, 4W)  final packed output block
    wmat = w_ref[...]
    bias = b_ref[...]
    dmat = d_ref[...]

    # Skip connection: dense block copy into the upper channel slice (fused concat).
    o_ref[0, c_out:, :, :] = r_ref[0].astype(o_ref.dtype)

    two_w = 2 * w_in
    # Static unroll over the rows of this block.
    # NOTE: for tiny C_in (as in this test) the MXU is mostly idle and a VPU
    # broadcast-multiply-add would also work; the op is memory-bound either way.
    for i in range(th):
        x_row = x_ref[0, :, i, :]                                   # (C_in, W)
        y = jnp.dot(wmat, x_row,
                    preferred_element_type=jnp.float32) + bias      # (C_out, W)
        # W-doubling (nearest upsample along width) as an MXU matmul with 0/1 D.
        y2 = jnp.dot(y, dmat,
                     preferred_element_type=jnp.float32)            # (C_out, 2W)
        y2 = y2.astype(o_ref.dtype)
        # H-doubling: output rows 2h and 2h+1 are identical -> write the same
        # 2W-wide row into both halves of the packed 4W row.
        o_ref[0, :c_out, i, :two_w] = y2
        o_ref[0, :c_out, i, two_w:] = y2


def _choose_row_block(H, W, C_in, C_r, C_out, budget_bytes=8 * 1024 * 1024):
    """Largest row block TH (divisor of H; TH % 8 == 0 unless TH == H) whose
    double-buffered block footprint stays under `budget_bytes`."""
    bytes_per_row = 2 * 4 * (C_in * W + C_r * 4 * W + (C_out + C_r) * 4 * W)
    valid = [th for th in range(1, H + 1)
             if H % th == 0 and (th == H or th % 8 == 0)]
    fitting = [th for th in valid if th * bytes_per_row <= budget_bytes]
    return max(fitting) if fitting else min(valid)


def upsampling_forward(x, r, weight, bias):
    """x: (N, C_in, H, W), r: (N, C_r, 2H, 2W), weight: (C_out, C_in), bias: (C_out,).
    Returns (N, C_out + C_r, 2H, 2W) — same semantics as the PyTorch module."""
    N, C_in, H, W = x.shape
    C_out = weight.shape[0]
    _, C_r, _, _ = r.shape
    C_total = C_out + C_r

    th = _choose_row_block(H, W, C_in, C_r, C_out)
    grid = (N, H // th)

    # Free, row-major metadata reshapes (no HBM passes).
    r4 = r.reshape(N, C_r, H, 4 * W)                       # packed pair-of-rows view
    wmat = weight.reshape(C_out, C_in)
    b2 = bias.reshape(C_out, 1).astype(jnp.float32)
    # Column-doubling matrix: d[w, j] = 1 iff j // 2 == w.
    d = (jnp.arange(2 * W) // 2 == jnp.arange(W)[:, None]).astype(jnp.float32)

    kernel = functools.partial(_upsample_concat_kernel,
                               c_out=C_out, th=th, w_in=W)

    out4 = pl.pallas_call(
        kernel,
        out_shape=jax.ShapeDtypeStruct((N, C_total, H, 4 * W), x.dtype),
        grid_spec=pltpu.PrefetchScalarGridSpec(
            num_scalar_prefetch=0,
            grid=grid,
            in_specs=[
                pl.BlockSpec((1, C_in, th, W), lambda n, h: (n, 0, h, 0)),
                pl.BlockSpec((1, C_r, th, 4 * W), lambda n, h: (n, 0, h, 0)),
                # Constant-index blocks (weight / bias / D) are tiny here; default
                # double-buffering costs negligible VMEM at these channel counts.
                pl.BlockSpec((C_out, C_in), lambda n, h: (0, 0)),
                pl.BlockSpec((C_out, 1), lambda n, h: (0, 0)),
                pl.BlockSpec((W, 2 * W), lambda n, h: (0, 0)),
            ],
            out_specs=pl.BlockSpec((1, C_total, th, 4 * W),
                                   lambda n, h: (n, 0, h, 0)),
        ),
        compiler_params=pltpu.CompilerParams(
            dimension_semantics=("parallel", "parallel"),
            vmem_limit_bytes=32 * 1024 * 1024,
        ),
    )(x, r4, wmat, b2, d)

    # Free view back to NCHW at 2x resolution.
    return out4.reshape(N, C_total, 2 * H, 2 * W)


if __name__ == "__main__":
    key = jax.random.PRNGKey(0)
    k_x, k_r, k_w, k_b = jax.random.split(key, 4)

    N, C_in, H, W = 2, 4, 16, 16
    C_out = C_in // 2            # typical U-Net up path: halve channels
    C_r = C_out                  # skip connection channels

    x = jax.random.normal(k_x, (N, C_in, H, W), dtype=jnp.float32)
    r = jax.random.normal(k_r, (N, C_r, 2 * H, 2 * W), dtype=jnp.float32)

    # Conv2d(C_in, C_out, kernel_size=1) parameters.
    bound = 1.0 / (C_in ** 0.5)
    weight = jax.random.uniform(k_w, (C_out, C_in), minval=-bound, maxval=bound,
                                dtype=jnp.float32)
    bias = jax.random.uniform(k_b, (C_out,), minval=-bound, maxval=bound,
                              dtype=jnp.float32)

    out = jax.jit(upsampling_forward)(x, r, weight, bias)
    out = jax.block_until_ready(out)

    # Pure-JAX reference (matches the PyTorch module).
    up_ref = jnp.repeat(jnp.repeat(x, 2, axis=2), 2, axis=3)
    y_ref = jnp.einsum('nchw,oc->nohw', up_ref, weight) + bias[None, :, None, None]
    ref = jnp.concatenate([y_ref, r], axis=1)

    assert out.shape == (N, C_out + C_r, 2 * H, 2 * W), out.shape
    assert jnp.allclose(out, ref, atol=1e-4, rtol=1e-4), \
        float(jnp.max(jnp.abs(out - ref)))
    print("KERNEL_OK")
</pallas_src>

<mosaic_0001>
module attributes {stable_mosaic.version = 11 : i64} {
  func.func @_upsample_concat_kernel(%arg0: i32, %arg1: i32, %arg2: memref<1x4x16x16xf32, #tpu.memory_space<vmem>>, %arg3: memref<1x2x16x64xf32, #tpu.memory_space<vmem>>, %arg4: memref<2x4xf32, #tpu.memory_space<vmem>>, %arg5: memref<2x1xf32, #tpu.memory_space<vmem>>, %arg6: memref<16x32xf32, #tpu.memory_space<vmem>>, %arg7: memref<1x4x16x64xf32, #tpu.memory_space<vmem>>) attributes {dimension_semantics = [#tpu.dimension_semantics<parallel>, #tpu.dimension_semantics<parallel>], iteration_bounds = array<i64: 2, 1>, scalar_prefetch = 0 : i64, scratch_operands = 0 : i64, tpu.core_type = #tpu.core_type<tc>, window_params = [{transform_indices = @transform_0, window_bounds = array<i64: 1, 4, 16, 16>}, {transform_indices = @transform_1, window_bounds = array<i64: 1, 2, 16, 64>}, {pipeline_mode = #tpu.pipeline_mode<synchronous>, transform_indices = @transform_2, window_bounds = array<i64: 2, 4>}, {pipeline_mode = #tpu.pipeline_mode<synchronous>, transform_indices = @transform_3, window_bounds = array<i64: 2, 1>}, {pipeline_mode = #tpu.pipeline_mode<synchronous>, transform_indices = @transform_4, window_bounds = array<i64: 16, 32>}, {transform_indices = @transform_5, window_bounds = array<i64: 1, 4, 16, 64>}]} {
    %c0 = arith.constant 0 : index
    %c0_0 = arith.constant 0 : index
    %0 = vector.load %arg4[%c0, %c0_0] : memref<2x4xf32, #tpu.memory_space<vmem>>, vector<2x4xf32>
    %c0_1 = arith.constant 0 : index
    %c0_2 = arith.constant 0 : index
    %1 = vector.load %arg5[%c0_1, %c0_2] : memref<2x1xf32, #tpu.memory_space<vmem>>, vector<2x1xf32>
    %c0_3 = arith.constant 0 : index
    %c0_4 = arith.constant 0 : index
    %2 = vector.load %arg6[%c0_3, %c0_4] : memref<16x32xf32, #tpu.memory_space<vmem>>, vector<16x32xf32>
    %c0_5 = arith.constant 0 : index
    %c0_6 = arith.constant 0 : index
    %c0_7 = arith.constant 0 : index
    %c0_8 = arith.constant 0 : index
    %3 = vector.load %arg3[%c0_5, %c0_6, %c0_7, %c0_8] : memref<1x2x16x64xf32, #tpu.memory_space<vmem>>, vector<1x2x16x64xf32>
    %4 = vector.shape_cast %3 : vector<1x2x16x64xf32> to vector<2x16x64xf32>
    %c0_9 = arith.constant 0 : index
    %c2 = arith.constant 2 : index
    %c0_10 = arith.constant 0 : index
    %c0_11 = arith.constant 0 : index
    %5 = vector.load %arg7[%c0_9, %c2, %c0_10, %c0_11] : memref<1x4x16x64xf32, #tpu.memory_space<vmem>>, vector<1x2x16x64xf32>
    %6 = vector.shape_cast %5 : vector<1x2x16x64xf32> to vector<2x16x64xf32>
    %7 = vector.shape_cast %4 : vector<2x16x64xf32> to vector<1x2x16x64xf32>
    tpu.vector_store %arg7[%c0_9, %c2, %c0_10, %c0_11], %7 {strides = array<i32>} : memref<1x4x16x64xf32, #tpu.memory_space<vmem>>, vector<1x2x16x64xf32>,
    %c0_12 = arith.constant 0 : index
    %c0_13 = arith.constant 0 : index
    %c0_14 = arith.constant 0 : index
    %c0_15 = arith.constant 0 : index
    %8 = vector.load %arg2[%c0_12, %c0_13, %c0_14, %c0_15] : memref<1x4x16x16xf32, #tpu.memory_space<vmem>>, vector<1x4x1x16xf32>
    %9 = vector.shape_cast %8 : vector<1x4x1x16xf32> to vector<4x16xf32>
    %cst = arith.constant dense<0.000000e+00> : vector<2x16xf32>
    %10 = tpu.matmul %0, %9, %cst {dimension_numbers = #tpu.dot_dimension_numbers<[1], [0], [0], [1], [0, 0, 1, 1], [], []>} : vector<2x4xf32>, vector<4x16xf32>, vector<2x16xf32> -> vector<2x16xf32>
    %11 = vector.broadcast %1 : vector<2x1xf32> to vector<2x16xf32>
    %12 = arith.addf %10, %11 : vector<2x16xf32>
    %cst_16 = arith.constant dense<0.000000e+00> : vector<2x32xf32>
    %13 = tpu.matmul %12, %2, %cst_16 {dimension_numbers = #tpu.dot_dimension_numbers<[1], [0], [0], [1], [0, 0, 1, 1], [], []>} : vector<2x16xf32>, vector<16x32xf32>, vector<2x32xf32> -> vector<2x32xf32>
    %c0_17 = arith.constant 0 : index
    %c0_18 = arith.constant 0 : index
    %c0_19 = arith.constant 0 : index
    %c0_20 = arith.constant 0 : index
    %14 = vector.load %arg7[%c0_17, %c0_18, %c0_19, %c0_20] : memref<1x4x16x64xf32, #tpu.memory_space<vmem>>, vector<1x2x1x32xf32>
    %15 = vector.shape_cast %14 : vector<1x2x1x32xf32> to vector<2x32xf32>
    %16 = vector.shape_cast %13 : vector<2x32xf32> to vector<1x2x1x32xf32>
    tpu.vector_store %arg7[%c0_17, %c0_18, %c0_19, %c0_20], %16 {strides = array<i32>} : memref<1x4x16x64xf32, #tpu.memory_space<vmem>>, vector<1x2x1x32xf32>,
    %c0_21 = arith.constant 0 : index
    %c0_22 = arith.constant 0 : index
    %c0_23 = arith.constant 0 : index
    %c32 = arith.constant 32 : index
    %17 = vector.load %arg7[%c0_21, %c0_22, %c0_23, %c32] : memref<1x4x16x64xf32, #tpu.memory_space<vmem>>, vector<1x2x1x32xf32>
    %18 = vector.shape_cast %17 : vector<1x2x1x32xf32> to vector<2x32xf32>
    %19 = vector.shape_cast %13 : vector<2x32xf32> to vector<1x2x1x32xf32>
    tpu.vector_store %arg7[%c0_21, %c0_22, %c0_23, %c32], %19 {strides = array<i32>} : memref<1x4x16x64xf32, #tpu.memory_space<vmem>>, vector<1x2x1x32xf32>,
    %c0_24 = arith.constant 0 : index
    %c0_25 = arith.constant 0 : index
    %c1 = arith.constant 1 : index
    %c0_26 = arith.constant 0 : index
    %20 = vector.load %arg2[%c0_24, %c0_25, %c1, %c0_26] : memref<1x4x16x16xf32, #tpu.memory_space<vmem>>, vector<1x4x1x16xf32>
    %21 = vector.shape_cast %20 : vector<1x4x1x16xf32> to vector<4x16xf32>
    %cst_27 = arith.constant dense<0.000000e+00> : vector<2x16xf32>
    %22 = tpu.matmul %0, %21, %cst_27 {dimension_numbers = #tpu.dot_dimension_numbers<[1], [0], [0], [1], [0, 0, 1, 1], [], []>} : vector<2x4xf32>, vector<4x16xf32>, vector<2x16xf32> -> vector<2x16xf32>
    %23 = vector.broadcast %1 : vector<2x1xf32> to vector<2x16xf32>
    %24 = arith.addf %22, %23 : vector<2x16xf32>
    %cst_28 = arith.constant dense<0.000000e+00> : vector<2x32xf32>
    %25 = tpu.matmul %24, %2, %cst_28 {dimension_numbers = #tpu.dot_dimension_numbers<[1], [0], [0], [1], [0, 0, 1, 1], [], []>} : vector<2x16xf32>, vector<16x32xf32>, vector<2x32xf32> -> vector<2x32xf32>
    %c0_29 = arith.constant 0 : index
    %c0_30 = arith.constant 0 : index
    %c1_31 = arith.constant 1 : index
    %c0_32 = arith.constant 0 : index
    %26 = vector.load %arg7[%c0_29, %c0_30, %c1_31, %c0_32] : memref<1x4x16x64xf32, #tpu.memory_space<vmem>>, vector<1x2x1x32xf32>
    %27 = vector.shape_cast %26 : vector<1x2x1x32xf32> to vector<2x32xf32>
    %28 = vector.shape_cast %25 : vector<2x32xf32> to vector<1x2x1x32xf32>
    tpu.vector_store %arg7[%c0_29, %c0_30, %c1_31, %c0_32], %28 {strides = array<i32>} : memref<1x4x16x64xf32, #tpu.memory_space<vmem>>, vector<1x2x1x32xf32>,
    %c0_33 = arith.constant 0 : index
    %c0_34 = arith.constant 0 : index
    %c1_35 = arith.constant 1 : index
    %c32_36 = arith.constant 32 : index
    %29 = vector.load %arg7[%c0_33, %c0_34, %c1_35, %c32_36] : memref<1x4x16x64xf32, #tpu.memory_space<vmem>>, vector<1x2x1x32xf32>
    %30 = vector.shape_cast %29 : vector<1x2x1x32xf32> to vector<2x32xf32>
    %31 = vector.shape_cast %25 : vector<2x32xf32> to vector<1x2x1x32xf32>
    tpu.vector_store %arg7[%c0_33, %c0_34, %c1_35, %c32_36], %31 {strides = array<i32>} : memref<1x4x16x64xf32, #tpu.memory_space<vmem>>, vector<1x2x1x32xf32>,
    %c0_37 = arith.constant 0 : index
    %c0_38 = arith.constant 0 : index
    %c2_39 = arith.constant 2 : index
    %c0_40 = arith.constant 0 : index
    %32 = vector.load %arg2[%c0_37, %c0_38, %c2_39, %c0_40] : memref<1x4x16x16xf32, #tpu.memory_space<vmem>>, vector<1x4x1x16xf32>
    %33 = vector.shape_cast %32 : vector<1x4x1x16xf32> to vector<4x16xf32>
    %cst_41 = arith.constant dense<0.000000e+00> : vector<2x16xf32>
    %34 = tpu.matmul %0, %33, %cst_41 {dimension_numbers = #tpu.dot_dimension_numbers<[1], [0], [0], [1], [0, 0, 1, 1], [], []>} : vector<2x4xf32>, vector<4x16xf32>, vector<2x16xf32> -> vector<2x16xf32>
    %35 = vector.broadcast %1 : vector<2x1xf32> to vector<2x16xf32>
    %36 = arith.addf %34, %35 : vector<2x16xf32>
    %cst_42 = arith.constant dense<0.000000e+00> : vector<2x32xf32>
    %37 = tpu.matmul %36, %2, %cst_42 {dimension_numbers = #tpu.dot_dimension_numbers<[1], [0], [0], [1], [0, 0, 1, 1], [], []>} : vector<2x16xf32>, vector<16x32xf32>, vector<2x32xf32> -> vector<2x32xf32>
    %c0_43 = arith.constant 0 : index
    %c0_44 = arith.constant 0 : index
    %c2_45 = arith.constant 2 : index
    %c0_46 = arith.constant 0 : index
    %38 = vector.load %arg7[%c0_43, %c0_44, %c2_45, %c0_46] : memref<1x4x16x64xf32, #tpu.memory_space<vmem>>, vector<1x2x1x32xf32>
    %39 = vector.shape_cast %38 : vector<1x2x1x32xf32> to vector<2x32xf32>
    %40 = vector.shape_cast %37 : vector<2x32xf32> to vector<1x2x1x32xf32>
    tpu.vector_store %arg7[%c0_43, %c0_44, %c2_45, %c0_46], %40 {strides = array<i32>} : memref<1x4x16x64xf32, #tpu.memory_space<vmem>>, vector<1x2x1x32xf32>,
    %c0_47 = arith.constant 0 : index
    %c0_48 = arith.constant 0 : index
    %c2_49 = arith.constant 2 : index
    %c32_50 = arith.constant 32 : index
    %41 = vector.load %arg7[%c0_47, %c0_48, %c2_49, %c32_50] : memref<1x4x16x64xf32, #tpu.memory_space<vmem>>, vector<1x2x1x32xf32>
    %42 = vector.shape_cast %41 : vector<1x2x1x32xf32> to vector<2x32xf32>
    %43 = vector.shape_cast %37 : vector<2x32xf32> to vector<1x2x1x32xf32>
    tpu.vector_store %arg7[%c0_47, %c0_48, %c2_49, %c32_50], %43 {strides = array<i32>} : memref<1x4x16x64xf32, #tpu.memory_space<vmem>>, vector<1x2x1x32xf32>,
    %c0_51 = arith.constant 0 : index
    %c0_52 = arith.constant 0 : index
    %c3 = arith.constant 3 : index
    %c0_53 = arith.constant 0 : index
    %44 = vector.load %arg2[%c0_51, %c0_52, %c3, %c0_53] : memref<1x4x16x16xf32, #tpu.memory_space<vmem>>, vector<1x4x1x16xf32>
    %45 = vector.shape_cast %44 : vector<1x4x1x16xf32> to vector<4x16xf32>
    %cst_54 = arith.constant dense<0.000000e+00> : vector<2x16xf32>
    %46 = tpu.matmul %0, %45, %cst_54 {dimension_numbers = #tpu.dot_dimension_numbers<[1], [0], [0], [1], [0, 0, 1, 1], [], []>} : vector<2x4xf32>, vector<4x16xf32>, vector<2x16xf32> -> vector<2x16xf32>
    %47 = vector.broadcast %1 : vector<2x1xf32> to vector<2x16xf32>
    %48 = arith.addf %46, %47 : vector<2x16xf32>
    %cst_55 = arith.constant dense<0.000000e+00> : vector<2x32xf32>
    %49 = tpu.matmul %48, %2, %cst_55 {dimension_numbers = #tpu.dot_dimension_numbers<[1], [0], [0], [1], [0, 0, 1, 1], [], []>} : vector<2x16xf32>, vector<16x32xf32>, vector<2x32xf32> -> vector<2x32xf32>
    %c0_56 = arith.constant 0 : index
    %c0_57 = arith.constant 0 : index
    %c3_58 = arith.constant 3 : index
    %c0_59 = arith.constant 0 : index
    %50 = vector.load %arg7[%c0_56, %c0_57, %c3_58, %c0_59] : memref<1x4x16x64xf32, #tpu.memory_space<vmem>>, vector<1x2x1x32xf32>
    %51 = vector.shape_cast %50 : vector<1x2x1x32xf32> to vector<2x32xf32>
    %52 = vector.shape_cast %49 : vector<2x32xf32> to vector<1x2x1x32xf32>
    tpu.vector_store %arg7[%c0_56, %c0_57, %c3_58, %c0_59], %52 {strides = array<i32>} : memref<1x4x16x64xf32, #tpu.memory_space<vmem>>, vector<1x2x1x32xf32>,
    %c0_60 = arith.constant 0 : index
    %c0_61 = arith.constant 0 : index
    %c3_62 = arith.constant 3 : index
    %c32_63 = arith.constant 32 : index
    %53 = vector.load %arg7[%c0_60, %c0_61, %c3_62, %c32_63] : memref<1x4x16x64xf32, #tpu.memory_space<vmem>>, vector<1x2x1x32xf32>
    %54 = vector.shape_cast %53 : vector<1x2x1x32xf32> to vector<2x32xf32>
    %55 = vector.shape_cast %49 : vector<2x32xf32> to vector<1x2x1x32xf32>
    tpu.vector_store %arg7[%c0_60, %c0_61, %c3_62, %c32_63], %55 {strides = array<i32>} : memref<1x4x16x64xf32, #tpu.memory_space<vmem>>, vector<1x2x1x32xf32>,
    %c0_64 = arith.constant 0 : index
    %c0_65 = arith.constant 0 : index
    %c4 = arith.constant 4 : index
    %c0_66 = arith.constant 0 : index
    %56 = vector.load %arg2[%c0_64, %c0_65, %c4, %c0_66] : memref<1x4x16x16xf32, #tpu.memory_space<vmem>>, vector<1x4x1x16xf32>
    %57 = vector.shape_cast %56 : vector<1x4x1x16xf32> to vector<4x16xf32>
    %cst_67 = arith.constant dense<0.000000e+00> : vector<2x16xf32>
    %58 = tpu.matmul %0, %57, %cst_67 {dimension_numbers = #tpu.dot_dimension_numbers<[1], [0], [0], [1], [0, 0, 1, 1], [], []>} : vector<2x4xf32>, vector<4x16xf32>, vector<2x16xf32> -> vector<2x16xf32>
    %59 = vector.broadcast %1 : vector<2x1xf32> to vector<2x16xf32>
    %60 = arith.addf %58, %59 : vector<2x16xf32>
    %cst_68 = arith.constant dense<0.000000e+00> : vector<2x32xf32>
    %61 = tpu.matmul %60, %2, %cst_68 {dimension_numbers = #tpu.dot_dimension_numbers<[1], [0], [0], [1], [0, 0, 1, 1], [], []>} : vector<2x16xf32>, vector<16x32xf32>, vector<2x32xf32> -> vector<2x32xf32>
    %c0_69 = arith.constant 0 : index
    %c0_70 = arith.constant 0 : index
    %c4_71 = arith.constant 4 : index
    %c0_72 = arith.constant 0 : index
    %62 = vector.load %arg7[%c0_69, %c0_70, %c4_71, %c0_72] : memref<1x4x16x64xf32, #tpu.memory_space<vmem>>, vector<1x2x1x32xf32>
    %63 = vector.shape_cast %62 : vector<1x2x1x32xf32> to vector<2x32xf32>
    %64 = vector.shape_cast %61 : vector<2x32xf32> to vector<1x2x1x32xf32>
    tpu.vector_store %arg7[%c0_69, %c0_70, %c4_71, %c0_72], %64 {strides = array<i32>} : memref<1x4x16x64xf32, #tpu.memory_space<vmem>>, vector<1x2x1x32xf32>,
    %c0_73 = arith.constant 0 : index
    %c0_74 = arith.constant 0 : index
    %c4_75 = arith.constant 4 : index
    %c32_76 = arith.constant 32 : index
    %65 = vector.load %arg7[%c0_73, %c0_74, %c4_75, %c32_76] : memref<1x4x16x64xf32, #tpu.memory_space<vmem>>, vector<1x2x1x32xf32>
    %66 = vector.shape_cast %65 : vector<1x2x1x32xf32> to vector<2x32xf32>
    %67 = vector.shape_cast %61 : vector<2x32xf32> to vector<1x2x1x32xf32>
    tpu.vector_store %arg7[%c0_73, %c0_74, %c4_75, %c32_76], %67 {strides = array<i32>} : memref<1x4x16x64xf32, #tpu.memory_space<vmem>>, vector<1x2x1x32xf32>,
    %c0_77 = arith.constant 0 : index
    %c0_78 = arith.constant 0 : index
    %c5 = arith.constant 5 : index
    %c0_79 = arith.constant 0 : index
    %68 = vector.load %arg2[%c0_77, %c0_78, %c5, %c0_79] : memref<1x4x16x16xf32, #tpu.memory_space<vmem>>, vector<1x4x1x16xf32>
    %69 = vector.shape_cast %68 : vector<1x4x1x16xf32> to vector<4x16xf32>
    %cst_80 = arith.constant dense<0.000000e+00> : vector<2x16xf32>
    %70 = tpu.matmul %0, %69, %cst_80 {dimension_numbers = #tpu.dot_dimension_numbers<[1], [0], [0], [1], [0, 0, 1, 1], [], []>} : vector<2x4xf32>, vector<4x16xf32>, vector<2x16xf32> -> vector<2x16xf32>
    %71 = vector.broadcast %1 : vector<2x1xf32> to vector<2x16xf32>
    %72 = arith.addf %70, %71 : vector<2x16xf32>
    %cst_81 = arith.constant dense<0.000000e+00> : vector<2x32xf32>
    %73 = tpu.matmul %72, %2, %cst_81 {dimension_numbers = #tpu.dot_dimension_numbers<[1], [0], [0], [1], [0, 0, 1, 1], [], []>} : vector<2x16xf32>, vector<16x32xf32>, vector<2x32xf32> -> vector<2x32xf32>
    %c0_82 = arith.constant 0 : index
    %c0_83 = arith.constant 0 : index
    %c5_84 = arith.constant 5 : index
    %c0_85 = arith.constant 0 : index
    %74 = vector.load %arg7[%c0_82, %c0_83, %c5_84, %c0_85] : memref<1x4x16x64xf32, #tpu.memory_space<vmem>>, vector<1x2x1x32xf32>
    %75 = vector.shape_cast %74 : vector<1x2x1x32xf32> to vector<2x32xf32>
    %76 = vector.shape_cast %73 : vector<2x32xf32> to vector<1x2x1x32xf32>
    tpu.vector_store %arg7[%c0_82, %c0_83, %c5_84, %c0_85], %76 {strides = array<i32>} : memref<1x4x16x64xf32, #tpu.memory_space<vmem>>, vector<1x2x1x32xf32>,
    %c0_86 = arith.constant 0 : index
    %c0_87 = arith.constant 0 : index
    %c5_88 = arith.constant 5 : index
    %c32_89 = arith.constant 32 : index
    %77 = vector.load %arg7[%c0_86, %c0_87, %c5_88, %c32_89] : memref<1x4x16x64xf32, #tpu.memory_space<vmem>>, vector<1x2x1x32xf32>
    %78 = vector.shape_cast %77 : vector<1x2x1x32xf32> to vector<2x32xf32>
    %79 = vector.shape_cast %73 : vector<2x32xf32> to vector<1x2x1x32xf32>
    tpu.vector_store %arg7[%c0_86, %c0_87, %c5_88, %c32_89], %79 {strides = array<i32>} : memref<1x4x16x64xf32, #tpu.memory_space<vmem>>, vector<1x2x1x32xf32>,
    %c0_90 = arith.constant 0 : index
    %c0_91 = arith.constant 0 : index
    %c6 = arith.constant 6 : index
    %c0_92 = arith.constant 0 : index
    %80 = vector.load %arg2[%c0_90, %c0_91, %c6, %c0_92] : memref<1x4x16x16xf32, #tpu.memory_space<vmem>>, vector<1x4x1x16xf32>
    %81 = vector.shape_cast %80 : vector<1x4x1x16xf32> to vector<4x16xf32>
    %cst_93 = arith.constant dense<0.000000e+00> : vector<2x16xf32>
    %82 = tpu.matmul %0, %81, %cst_93 {dimension_numbers = #tpu.dot_dimension_numbers<[1], [0], [0], [1], [0, 0, 1, 1], [], []>} : vector<2x4xf32>, vector<4x16xf32>, vector<2x16xf32> -> vector<2x16xf32>
    %83 = vector.broadcast %1 : vector<2x1xf32> to vector<2x16xf32>
    %84 = arith.addf %82, %83 : vector<2x16xf32>
    %cst_94 = arith.constant dense<0.000000e+00> : vector<2x32xf32>
    %85 = tpu.matmul %84, %2, %cst_94 {dimension_numbers = #tpu.dot_dimension_numbers<[1], [0], [0], [1], [0, 0, 1, 1], [], []>} : vector<2x16xf32>, vector<16x32xf32>, vector<2x32xf32> -> vector<2x32xf32>
    %c0_95 = arith.constant 0 : index
    %c0_96 = arith.constant 0 : index
    %c6_97 = arith.constant 6 : index
    %c0_98 = arith.constant 0 : index
    %86 = vector.load %arg7[%c0_95, %c0_96, %c6_97, %c0_98] : memref<1x4x16x64xf32, #tpu.memory_space<vmem>>, vector<1x2x1x32xf32>
    %87 = vector.shape_cast %86 : vector<1x2x1x32xf32> to vector<2x32xf32>
    %88 = vector.shape_cast %85 : vector<2x32xf32> to vector<1x2x1x32xf32>
    tpu.vector_store %arg7[%c0_95, %c0_96, %c6_97, %c0_98], %88 {strides = array<i32>} : memref<1x4x16x64xf32, #tpu.memory_space<vmem>>, vector<1x2x1x32xf32>,
    %c0_99 = arith.constant 0 : index
    %c0_100 = arith.constant 0 : index
    %c6_101 = arith.constant 6 : index
    %c32_102 = arith.constant 32 : index
    %89 = vector.load %arg7[%c0_99, %c0_100, %c6_101, %c32_102] : memref<1x4x16x64xf32, #tpu.memory_space<vmem>>, vector<1x2x1x32xf32>
    %90 = vector.shape_cast %89 : vector<1x2x1x32xf32> to vector<2x32xf32>
    %91 = vector.shape_cast %85 : vector<2x32xf32> to vector<1x2x1x32xf32>
    tpu.vector_store %arg7[%c0_99, %c0_100, %c6_101, %c32_102], %91 {strides = array<i32>} : memref<1x4x16x64xf32, #tpu.memory_space<vmem>>, vector<1x2x1x32xf32>,
    %c0_103 = arith.constant 0 : index
    %c0_104 = arith.constant 0 : index
    %c7 = arith.constant 7 : index
    %c0_105 = arith.constant 0 : index
    %92 = vector.load %arg2[%c0_103, %c0_104, %c7, %c0_105] : memref<1x4x16x16xf32, #tpu.memory_space<vmem>>, vector<1x4x1x16xf32>
    %93 = vector.shape_cast %92 : vector<1x4x1x16xf32> to vector<4x16xf32>
    %cst_106 = arith.constant dense<0.000000e+00> : vector<2x16xf32>
    %94 = tpu.matmul %0, %93, %cst_106 {dimension_numbers = #tpu.dot_dimension_numbers<[1], [0], [0], [1], [0, 0, 1, 1], [], []>} : vector<2x4xf32>, vector<4x16xf32>, vector<2x16xf32> -> vector<2x16xf32>
    %95 = vector.broadcast %1 : vector<2x1xf32> to vector<2x16xf32>
    %96 = arith.addf %94, %95 : vector<2x16xf32>
    %cst_107 = arith.constant dense<0.000000e+00> : vector<2x32xf32>
    %97 = tpu.matmul %96, %2, %cst_107 {dimension_numbers = #tpu.dot_dimension_numbers<[1], [0], [0], [1], [0, 0, 1, 1], [], []>} : vector<2x16xf32>, vector<16x32xf32>, vector<2x32xf32> -> vector<2x32xf32>
    %c0_108 = arith.constant 0 : index
    %c0_109 = arith.constant 0 : index
    %c7_110 = arith.constant 7 : index
    %c0_111 = arith.constant 0 : index
    %98 = vector.load %arg7[%c0_108, %c0_109, %c7_110, %c0_111] : memref<1x4x16x64xf32, #tpu.memory_space<vmem>>, vector<1x2x1x32xf32>
    %99 = vector.shape_cast %98 : vector<1x2x1x32xf32> to vector<2x32xf32>
    %100 = vector.shape_cast %97 : vector<2x32xf32> to vector<1x2x1x32xf32>
    tpu.vector_store %arg7[%c0_108, %c0_109, %c7_110, %c0_111], %100 {strides = array<i32>} : memref<1x4x16x64xf32, #tpu.memory_space<vmem>>, vector<1x2x1x32xf32>,
    %c0_112 = arith.constant 0 : index
    %c0_113 = arith.constant 0 : index
    %c7_114 = arith.constant 7 : index
    %c32_115 = arith.constant 32 : index
    %101 = vector.load %arg7[%c0_112, %c0_113, %c7_114, %c32_115] : memref<1x4x16x64xf32, #tpu.memory_space<vmem>>, vector<1x2x1x32xf32>
    %102 = vector.shape_cast %101 : vector<1x2x1x32xf32> to vector<2x32xf32>
    %103 = vector.shape_cast %97 : vector<2x32xf32> to vector<1x2x1x32xf32>
    tpu.vector_store %arg7[%c0_112, %c0_113, %c7_114, %c32_115], %103 {strides = array<i32>} : memref<1x4x16x64xf32, #tpu.memory_space<vmem>>, vector<1x2x1x32xf32>,
    %c0_116 = arith.constant 0 : index
    %c0_117 = arith.constant 0 : index
    %c8 = arith.constant 8 : index
    %c0_118 = arith.constant 0 : index
    %104 = vector.load %arg2[%c0_116, %c0_117, %c8, %c0_118] : memref<1x4x16x16xf32, #tpu.memory_space<vmem>>, vector<1x4x1x16xf32>
    %105 = vector.shape_cast %104 : vector<1x4x1x16xf32> to vector<4x16xf32>
    %cst_119 = arith.constant dense<0.000000e+00> : vector<2x16xf32>
    %106 = tpu.matmul %0, %105, %cst_119 {dimension_numbers = #tpu.dot_dimension_numbers<[1], [0], [0], [1], [0, 0, 1, 1], [], []>} : vector<2x4xf32>, vector<4x16xf32>, vector<2x16xf32> -> vector<2x16xf32>
    %107 = vector.broadcast %1 : vector<2x1xf32> to vector<2x16xf32>
    %108 = arith.addf %106, %107 : vector<2x16xf32>
    %cst_120 = arith.constant dense<0.000000e+00> : vector<2x32xf32>
    %109 = tpu.matmul %108, %2, %cst_120 {dimension_numbers = #tpu.dot_dimension_numbers<[1], [0], [0], [1], [0, 0, 1, 1], [], []>} : vector<2x16xf32>, vector<16x32xf32>, vector<2x32xf32> -> vector<2x32xf32>
    %c0_121 = arith.constant 0 : index
    %c0_122 = arith.constant 0 : index
    %c8_123 = arith.constant 8 : index
    %c0_124 = arith.constant 0 : index
    %110 = vector.load %arg7[%c0_121, %c0_122, %c8_123, %c0_124] : memref<1x4x16x64xf32, #tpu.memory_space<vmem>>, vector<1x2x1x32xf32>
    %111 = vector.shape_cast %110 : vector<1x2x1x32xf32> to vector<2x32xf32>
    %112 = vector.shape_cast %109 : vector<2x32xf32> to vector<1x2x1x32xf32>
    tpu.vector_store %arg7[%c0_121, %c0_122, %c8_123, %c0_124], %112 {strides = array<i32>} : memref<1x4x16x64xf32, #tpu.memory_space<vmem>>, vector<1x2x1x32xf32>,
    %c0_125 = arith.constant 0 : index
    %c0_126 = arith.constant 0 : index
    %c8_127 = arith.constant 8 : index
    %c32_128 = arith.constant 32 : index
    %113 = vector.load %arg7[%c0_125, %c0_126, %c8_127, %c32_128] : memref<1x4x16x64xf32, #tpu.memory_space<vmem>>, vector<1x2x1x32xf32>
    %114 = vector.shape_cast %113 : vector<1x2x1x32xf32> to vector<2x32xf32>
    %115 = vector.shape_cast %109 : vector<2x32xf32> to vector<1x2x1x32xf32>
    tpu.vector_store %arg7[%c0_125, %c0_126, %c8_127, %c32_128], %115 {strides = array<i32>} : memref<1x4x16x64xf32, #tpu.memory_space<vmem>>, vector<1x2x1x32xf32>,
    %c0_129 = arith.constant 0 : index
    %c0_130 = arith.constant 0 : index
    %c9 = arith.constant 9 : index
    %c0_131 = arith.constant 0 : index
    %116 = vector.load %arg2[%c0_129, %c0_130, %c9, %c0_131] : memref<1x4x16x16xf32, #tpu.memory_space<vmem>>, vector<1x4x1x16xf32>
    %117 = vector.shape_cast %116 : vector<1x4x1x16xf32> to vector<4x16xf32>
    %cst_132 = arith.constant dense<0.000000e+00> : vector<2x16xf32>
    %118 = tpu.matmul %0, %117, %cst_132 {dimension_numbers = #tpu.dot_dimension_numbers<[1], [0], [0], [1], [0, 0, 1, 1], [], []>} : vector<2x4xf32>, vector<4x16xf32>, vector<2x16xf32> -> vector<2x16xf32>
    %119 = vector.broadcast %1 : vector<2x1xf32> to vector<2x16xf32>
    %120 = arith.addf %118, %119 : vector<2x16xf32>
    %cst_133 = arith.constant dense<0.000000e+00> : vector<2x32xf32>
    %121 = tpu.matmul %120, %2, %cst_133 {dimension_numbers = #tpu.dot_dimension_numbers<[1], [0], [0], [1], [0, 0, 1, 1], [], []>} : vector<2x16xf32>, vector<16x32xf32>, vector<2x32xf32> -> vector<2x32xf32>
    %c0_134 = arith.constant 0 : index
    %c0_135 = arith.constant 0 : index
    %c9_136 = arith.constant 9 : index
    %c0_137 = arith.constant 0 : index
    %122 = vector.load %arg7[%c0_134, %c0_135, %c9_136, %c0_137] : memref<1x4x16x64xf32, #tpu.memory_space<vmem>>, vector<1x2x1x32xf32>
    %123 = vector.shape_cast %122 : vector<1x2x1x32xf32> to vector<2x32xf32>
    %124 = vector.shape_cast %121 : vector<2x32xf32> to vector<1x2x1x32xf32>
    tpu.vector_store %arg7[%c0_134, %c0_135, %c9_136, %c0_137], %124 {strides = array<i32>} : memref<1x4x16x64xf32, #tpu.memory_space<vmem>>, vector<1x2x1x32xf32>,
    %c0_138 = arith.constant 0 : index
    %c0_139 = arith.constant 0 : index
    %c9_140 = arith.constant 9 : index
    %c32_141 = arith.constant 32 : index
    %125 = vector.load %arg7[%c0_138, %c0_139, %c9_140, %c32_141] : memref<1x4x16x64xf32, #tpu.memory_space<vmem>>, vector<1x2x1x32xf32>
    %126 = vector.shape_cast %125 : vector<1x2x1x32xf32> to vector<2x32xf32>
    %127 = vector.shape_cast %121 : vector<2x32xf32> to vector<1x2x1x32xf32>
    tpu.vector_store %arg7[%c0_138, %c0_139, %c9_140, %c32_141], %127 {strides = array<i32>} : memref<1x4x16x64xf32, #tpu.memory_space<vmem>>, vector<1x2x1x32xf32>,
    %c0_142 = arith.constant 0 : index
    %c0_143 = arith.constant 0 : index
    %c10 = arith.constant 10 : index
    %c0_144 = arith.constant 0 : index
    %128 = vector.load %arg2[%c0_142, %c0_143, %c10, %c0_144] : memref<1x4x16x16xf32, #tpu.memory_space<vmem>>, vector<1x4x1x16xf32>
    %129 = vector.shape_cast %128 : vector<1x4x1x16xf32> to vector<4x16xf32>
    %cst_145 = arith.constant dense<0.000000e+00> : vector<2x16xf32>
    %130 = tpu.matmul %0, %129, %cst_145 {dimension_numbers = #tpu.dot_dimension_numbers<[1], [0], [0], [1], [0, 0, 1, 1], [], []>} : vector<2x4xf32>, vector<4x16xf32>, vector<2x16xf32> -> vector<2x16xf32>
    %131 = vector.broadcast %1 : vector<2x1xf32> to vector<2x16xf32>
    %132 = arith.addf %130, %131 : vector<2x16xf32>
    %cst_146 = arith.constant dense<0.000000e+00> : vector<2x32xf32>
    %133 = tpu.matmul %132, %2, %cst_146 {dimension_numbers = #tpu.dot_dimension_numbers<[1], [0], [0], [1], [0, 0, 1, 1], [], []>} : vector<2x16xf32>, vector<16x32xf32>, vector<2x32xf32> -> vector<2x32xf32>
    %c0_147 = arith.constant 0 : index
    %c0_148 = arith.constant 0 : index
    %c10_149 = arith.constant 10 : index
    %c0_150 = arith.constant 0 : index
    %134 = vector.load %arg7[%c0_147, %c0_148, %c10_149, %c0_150] : memref<1x4x16x64xf32, #tpu.memory_space<vmem>>, vector<1x2x1x32xf32>
    %135 = vector.shape_cast %134 : vector<1x2x1x32xf32> to vector<2x32xf32>
    %136 = vector.shape_cast %133 : vector<2x32xf32> to vector<1x2x1x32xf32>
    tpu.vector_store %arg7[%c0_147, %c0_148, %c10_149, %c0_150], %136 {strides = array<i32>} : memref<1x4x16x64xf32, #tpu.memory_space<vmem>>, vector<1x2x1x32xf32>,
    %c0_151 = arith.constant 0 : index
    %c0_152 = arith.constant 0 : index
    %c10_153 = arith.constant 10 : index
    %c32_154 = arith.constant 32 : index
    %137 = vector.load %arg7[%c0_151, %c0_152, %c10_153, %c32_154] : memref<1x4x16x64xf32, #tpu.memory_space<vmem>>, vector<1x2x1x32xf32>
    %138 = vector.shape_cast %137 : vector<1x2x1x32xf32> to vector<2x32xf32>
    %139 = vector.shape_cast %133 : vector<2x32xf32> to vector<1x2x1x32xf32>
    tpu.vector_store %arg7[%c0_151, %c0_152, %c10_153, %c32_154], %139 {strides = array<i32>} : memref<1x4x16x64xf32, #tpu.memory_space<vmem>>, vector<1x2x1x32xf32>,
    %c0_155 = arith.constant 0 : index
    %c0_156 = arith.constant 0 : index
    %c11 = arith.constant 11 : index
    %c0_157 = arith.constant 0 : index
    %140 = vector.load %arg2[%c0_155, %c0_156, %c11, %c0_157] : memref<1x4x16x16xf32, #tpu.memory_space<vmem>>, vector<1x4x1x16xf32>
    %141 = vector.shape_cast %140 : vector<1x4x1x16xf32> to vector<4x16xf32>
    %cst_158 = arith.constant dense<0.000000e+00> : vector<2x16xf32>
    %142 = tpu.matmul %0, %141, %cst_158 {dimension_numbers = #tpu.dot_dimension_numbers<[1], [0], [0], [1], [0, 0, 1, 1], [], []>} : vector<2x4xf32>, vector<4x16xf32>, vector<2x16xf32> -> vector<2x16xf32>
    %143 = vector.broadcast %1 : vector<2x1xf32> to vector<2x16xf32>
    %144 = arith.addf %142, %143 : vector<2x16xf32>
    %cst_159 = arith.constant dense<0.000000e+00> : vector<2x32xf32>
    %145 = tpu.matmul %144, %2, %cst_159 {dimension_numbers = #tpu.dot_dimension_numbers<[1], [0], [0], [1], [0, 0, 1, 1], [], []>} : vector<2x16xf32>, vector<16x32xf32>, vector<2x32xf32> -> vector<2x32xf32>
    %c0_160 = arith.constant 0 : index
    %c0_161 = arith.constant 0 : index
    %c11_162 = arith.constant 11 : index
    %c0_163 = arith.constant 0 : index
    %146 = vector.load %arg7[%c0_160, %c0_161, %c11_162, %c0_163] : memref<1x4x16x64xf32, #tpu.memory_space<vmem>>, vector<1x2x1x32xf32>
    %147 = vector.shape_cast %146 : vector<1x2x1x32xf32> to vector<2x32xf32>
    %148 = vector.shape_cast %145 : vector<2x32xf32> to vector<1x2x1x32xf32>
    tpu.vector_store %arg7[%c0_160, %c0_161, %c11_162, %c0_163], %148 {strides = array<i32>} : memref<1x4x16x64xf32, #tpu.memory_space<vmem>>, vector<1x2x1x32xf32>,
    %c0_164 = arith.constant 0 : index
    %c0_165 = arith.constant 0 : index
    %c11_166 = arith.constant 11 : index
    %c32_167 = arith.constant 32 : index
    %149 = vector.load %arg7[%c0_164, %c0_165, %c11_166, %c32_167] : memref<1x4x16x64xf32, #tpu.memory_space<vmem>>, vector<1x2x1x32xf32>
    %150 = vector.shape_cast %149 : vector<1x2x1x32xf32> to vector<2x32xf32>
    %151 = vector.shape_cast %145 : vector<2x32xf32> to vector<1x2x1x32xf32>
    tpu.vector_store %arg7[%c0_164, %c0_165, %c11_166, %c32_167], %151 {strides = array<i32>} : memref<1x4x16x64xf32, #tpu.memory_space<vmem>>, vector<1x2x1x32xf32>,
    %c0_168 = arith.constant 0 : index
    %c0_169 = arith.constant 0 : index
    %c12 = arith.constant 12 : index
    %c0_170 = arith.constant 0 : index
    %152 = vector.load %arg2[%c0_168, %c0_169, %c12, %c0_170] : memref<1x4x16x16xf32, #tpu.memory_space<vmem>>, vector<1x4x1x16xf32>
    %153 = vector.shape_cast %152 : vector<1x4x1x16xf32> to vector<4x16xf32>
    %cst_171 = arith.constant dense<0.000000e+00> : vector<2x16xf32>
    %154 = tpu.matmul %0, %153, %cst_171 {dimension_numbers = #tpu.dot_dimension_numbers<[1], [0], [0], [1], [0, 0, 1, 1], [], []>} : vector<2x4xf32>, vector<4x16xf32>, vector<2x16xf32> -> vector<2x16xf32>
    %155 = vector.broadcast %1 : vector<2x1xf32> to vector<2x16xf32>
    %156 = arith.addf %154, %155 : vector<2x16xf32>
    %cst_172 = arith.constant dense<0.000000e+00> : vector<2x32xf32>
    %157 = tpu.matmul %156, %2, %cst_172 {dimension_numbers = #tpu.dot_dimension_numbers<[1], [0], [0], [1], [0, 0, 1, 1], [], []>} : vector<2x16xf32>, vector<16x32xf32>, vector<2x32xf32> -> vector<2x32xf32>
    %c0_173 = arith.constant 0 : index
    %c0_174 = arith.constant 0 : index
    %c12_175 = arith.constant 12 : index
    %c0_176 = arith.constant 0 : index
    %158 = vector.load %arg7[%c0_173, %c0_174, %c12_175, %c0_176] : memref<1x4x16x64xf32, #tpu.memory_space<vmem>>, vector<1x2x1x32xf32>
    %159 = vector.shape_cast %158 : vector<1x2x1x32xf32> to vector<2x32xf32>
    %160 = vector.shape_cast %157 : vector<2x32xf32> to vector<1x2x1x32xf32>
    tpu.vector_store %arg7[%c0_173, %c0_174, %c12_175, %c0_176], %160 {strides = array<i32>} : memref<1x4x16x64xf32, #tpu.memory_space<vmem>>, vector<1x2x1x32xf32>,
    %c0_177 = arith.constant 0 : index
    %c0_178 = arith.constant 0 : index
    %c12_179 = arith.constant 12 : index
    %c32_180 = arith.constant 32 : index
    %161 = vector.load %arg7[%c0_177, %c0_178, %c12_179, %c32_180] : memref<1x4x16x64xf32, #tpu.memory_space<vmem>>, vector<1x2x1x32xf32>
    %162 = vector.shape_cast %161 : vector<1x2x1x32xf32> to vector<2x32xf32>
    %163 = vector.shape_cast %157 : vector<2x32xf32> to vector<1x2x1x32xf32>
    tpu.vector_store %arg7[%c0_177, %c0_178, %c12_179, %c32_180], %163 {strides = array<i32>} : memref<1x4x16x64xf32, #tpu.memory_space<vmem>>, vector<1x2x1x32xf32>,
    %c0_181 = arith.constant 0 : index
    %c0_182 = arith.constant 0 : index
    %c13 = arith.constant 13 : index
    %c0_183 = arith.constant 0 : index
    %164 = vector.load %arg2[%c0_181, %c0_182, %c13, %c0_183] : memref<1x4x16x16xf32, #tpu.memory_space<vmem>>, vector<1x4x1x16xf32>
    %165 = vector.shape_cast %164 : vector<1x4x1x16xf32> to vector<4x16xf32>
    %cst_184 = arith.constant dense<0.000000e+00> : vector<2x16xf32>
    %166 = tpu.matmul %0, %165, %cst_184 {dimension_numbers = #tpu.dot_dimension_numbers<[1], [0], [0], [1], [0, 0, 1, 1], [], []>} : vector<2x4xf32>, vector<4x16xf32>, vector<2x16xf32> -> vector<2x16xf32>
    %167 = vector.broadcast %1 : vector<2x1xf32> to vector<2x16xf32>
    %168 = arith.addf %166, %167 : vector<2x16xf32>
    %cst_185 = arith.constant dense<0.000000e+00> : vector<2x32xf32>
    %169 = tpu.matmul %168, %2, %cst_185 {dimension_numbers = #tpu.dot_dimension_numbers<[1], [0], [0], [1], [0, 0, 1, 1], [], []>} : vector<2x16xf32>, vector<16x32xf32>, vector<2x32xf32> -> vector<2x32xf32>
    %c0_186 = arith.constant 0 : index
    %c0_187 = arith.constant 0 : index
    %c13_188 = arith.constant 13 : index
    %c0_189 = arith.constant 0 : index
    %170 = vector.load %arg7[%c0_186, %c0_187, %c13_188, %c0_189] : memref<1x4x16x64xf32, #tpu.memory_space<vmem>>, vector<1x2x1x32xf32>
    %171 = vector.shape_cast %170 : vector<1x2x1x32xf32> to vector<2x32xf32>
    %172 = vector.shape_cast %169 : vector<2x32xf32> to vector<1x2x1x32xf32>
    tpu.vector_store %arg7[%c0_186, %c0_187, %c13_188, %c0_189], %172 {strides = array<i32>} : memref<1x4x16x64xf32, #tpu.memory_space<vmem>>, vector<1x2x1x32xf32>,
    %c0_190 = arith.constant 0 : index
    %c0_191 = arith.constant 0 : index
    %c13_192 = arith.constant 13 : index
    %c32_193 = arith.constant 32 : index
    %173 = vector.load %arg7[%c0_190, %c0_191, %c13_192, %c32_193] : memref<1x4x16x64xf32, #tpu.memory_space<vmem>>, vector<1x2x1x32xf32>
    %174 = vector.shape_cast %173 : vector<1x2x1x32xf32> to vector<2x32xf32>
    %175 = vector.shape_cast %169 : vector<2x32xf32> to vector<1x2x1x32xf32>
    tpu.vector_store %arg7[%c0_190, %c0_191, %c13_192, %c32_193], %175 {strides = array<i32>} : memref<1x4x16x64xf32, #tpu.memory_space<vmem>>, vector<1x2x1x32xf32>,
    %c0_194 = arith.constant 0 : index
    %c0_195 = arith.constant 0 : index
    %c14 = arith.constant 14 : index
    %c0_196 = arith.constant 0 : index
    %176 = vector.load %arg2[%c0_194, %c0_195, %c14, %c0_196] : memref<1x4x16x16xf32, #tpu.memory_space<vmem>>, vector<1x4x1x16xf32>
    %177 = vector.shape_cast %176 : vector<1x4x1x16xf32> to vector<4x16xf32>
    %cst_197 = arith.constant dense<0.000000e+00> : vector<2x16xf32>
    %178 = tpu.matmul %0, %177, %cst_197 {dimension_numbers = #tpu.dot_dimension_numbers<[1], [0], [0], [1], [0, 0, 1, 1], [], []>} : vector<2x4xf32>, vector<4x16xf32>, vector<2x16xf32> -> vector<2x16xf32>
    %179 = vector.broadcast %1 : vector<2x1xf32> to vector<2x16xf32>
    %180 = arith.addf %178, %179 : vector<2x16xf32>
    %cst_198 = arith.constant dense<0.000000e+00> : vector<2x32xf32>
    %181 = tpu.matmul %180, %2, %cst_198 {dimension_numbers = #tpu.dot_dimension_numbers<[1], [0], [0], [1], [0, 0, 1, 1], [], []>} : vector<2x16xf32>, vector<16x32xf32>, vector<2x32xf32> -> vector<2x32xf32>
    %c0_199 = arith.constant 0 : index
    %c0_200 = arith.constant 0 : index
    %c14_201 = arith.constant 14 : index
    %c0_202 = arith.constant 0 : index
    %182 = vector.load %arg7[%c0_199, %c0_200, %c14_201, %c0_202] : memref<1x4x16x64xf32, #tpu.memory_space<vmem>>, vector<1x2x1x32xf32>
    %183 = vector.shape_cast %182 : vector<1x2x1x32xf32> to vector<2x32xf32>
    %184 = vector.shape_cast %181 : vector<2x32xf32> to vector<1x2x1x32xf32>
    tpu.vector_store %arg7[%c0_199, %c0_200, %c14_201, %c0_202], %184 {strides = array<i32>} : memref<1x4x16x64xf32, #tpu.memory_space<vmem>>, vector<1x2x1x32xf32>,
    %c0_203 = arith.constant 0 : index
    %c0_204 = arith.constant 0 : index
    %c14_205 = arith.constant 14 : index
    %c32_206 = arith.constant 32 : index
    %185 = vector.load %arg7[%c0_203, %c0_204, %c14_205, %c32_206] : memref<1x4x16x64xf32, #tpu.memory_space<vmem>>, vector<1x2x1x32xf32>
    %186 = vector.shape_cast %185 : vector<1x2x1x32xf32> to vector<2x32xf32>
    %187 = vector.shape_cast %181 : vector<2x32xf32> to vector<1x2x1x32xf32>
    tpu.vector_store %arg7[%c0_203, %c0_204, %c14_205, %c32_206], %187 {strides = array<i32>} : memref<1x4x16x64xf32, #tpu.memory_space<vmem>>, vector<1x2x1x32xf32>,
    %c0_207 = arith.constant 0 : index
    %c0_208 = arith.constant 0 : index
    %c15 = arith.constant 15 : index
    %c0_209 = arith.constant 0 : index
    %188 = vector.load %arg2[%c0_207, %c0_208, %c15, %c0_209] : memref<1x4x16x16xf32, #tpu.memory_space<vmem>>, vector<1x4x1x16xf32>
    %189 = vector.shape_cast %188 : vector<1x4x1x16xf32> to vector<4x16xf32>
    %cst_210 = arith.constant dense<0.000000e+00> : vector<2x16xf32>
    %190 = tpu.matmul %0, %189, %cst_210 {dimension_numbers = #tpu.dot_dimension_numbers<[1], [0], [0], [1], [0, 0, 1, 1], [], []>} : vector<2x4xf32>, vector<4x16xf32>, vector<2x16xf32> -> vector<2x16xf32>
    %191 = vector.broadcast %1 : vector<2x1xf32> to vector<2x16xf32>
    %192 = arith.addf %190, %191 : vector<2x16xf32>
    %cst_211 = arith.constant dense<0.000000e+00> : vector<2x32xf32>
    %193 = tpu.matmul %192, %2, %cst_211 {dimension_numbers = #tpu.dot_dimension_numbers<[1], [0], [0], [1], [0, 0, 1, 1], [], []>} : vector<2x16xf32>, vector<16x32xf32>, vector<2x32xf32> -> vector<2x32xf32>
    %c0_212 = arith.constant 0 : index
    %c0_213 = arith.constant 0 : index
    %c15_214 = arith.constant 15 : index
    %c0_215 = arith.constant 0 : index
    %194 = vector.load %arg7[%c0_212, %c0_213, %c15_214, %c0_215] : memref<1x4x16x64xf32, #tpu.memory_space<vmem>>, vector<1x2x1x32xf32>
    %195 = vector.shape_cast %194 : vector<1x2x1x32xf32> to vector<2x32xf32>
    %196 = vector.shape_cast %193 : vector<2x32xf32> to vector<1x2x1x32xf32>
    tpu.vector_store %arg7[%c0_212, %c0_213, %c15_214, %c0_215], %196 {strides = array<i32>} : memref<1x4x16x64xf32, #tpu.memory_space<vmem>>, vector<1x2x1x32xf32>,
    %c0_216 = arith.constant 0 : index
    %c0_217 = arith.constant 0 : index
    %c15_218 = arith.constant 15 : index
    %c32_219 = arith.constant 32 : index
    %197 = vector.load %arg7[%c0_216, %c0_217, %c15_218, %c32_219] : memref<1x4x16x64xf32, #tpu.memory_space<vmem>>, vector<1x2x1x32xf32>
    %198 = vector.shape_cast %197 : vector<1x2x1x32xf32> to vector<2x32xf32>
    %199 = vector.shape_cast %193 : vector<2x32xf32> to vector<1x2x1x32xf32>
    tpu.vector_store %arg7[%c0_216, %c0_217, %c15_218, %c32_219], %199 {strides = array<i32>} : memref<1x4x16x64xf32, #tpu.memory_space<vmem>>, vector<1x2x1x32xf32>,
    return
  }
  func.func @transform_0(%arg0: i32, %arg1: i32) -> (i32, i32, i32, i32) {
    %c0_i32 = arith.constant 0 : i32
    %c0_i32_0 = arith.constant 0 : i32
    %c0_i32_1 = arith.constant 0 : i32
    return %arg0, %c0_i32, %arg1, %c0_i32_0 : i32, i32, i32, i32
  }
  func.func @transform_1(%arg0: i32, %arg1: i32) -> (i32, i32, i32, i32) {
    %c0_i32 = arith.constant 0 : i32
    %c0_i32_0 = arith.constant 0 : i32
    %c0_i32_1 = arith.constant 0 : i32
    return %arg0, %c0_i32, %arg1, %c0_i32_0 : i32, i32, i32, i32
  }
  func.func @transform_2(%arg0: i32, %arg1: i32) -> (i32, i32) {
    %c0_i32 = arith.constant 0 : i32
    %c0_i32_0 = arith.constant 0 : i32
    %c0_i32_1 = arith.constant 0 : i32
    return %c0_i32, %c0_i32_0 : i32, i32
  }
  func.func @transform_3(%arg0: i32, %arg1: i32) -> (i32, i32) {
    %c0_i32 = arith.constant 0 : i32
    %c0_i32_0 = arith.constant 0 : i32
    %c0_i32_1 = arith.constant 0 : i32
    return %c0_i32, %c0_i32_0 : i32, i32
  }
  func.func @transform_4(%arg0: i32, %arg1: i32) -> (i32, i32) {
    %c0_i32 = arith.constant 0 : i32
    %c0_i32_0 = arith.constant 0 : i32
    %c0_i32_1 = arith.constant 0 : i32
    return %c0_i32, %c0_i32_0 : i32, i32
  }
  func.func @transform_5(%arg0: i32, %arg1: i32) -> (i32, i32, i32, i32) {
    %c0_i32 = arith.constant 0 : i32
    %c0_i32_0 = arith.constant 0 : i32
    %c0_i32_1 = arith.constant 0 : i32
    return %arg0, %c0_i32, %arg1, %c0_i32_0 : i32, i32, i32, i32
  }
}

</mosaic_0001>

<llo_original>
// kernel: upsampling_forward.1
$region0: #{upsampling_forward.1}
  #allocation0 [shape = 'u32[]', space=smem, size = 0x4, offset = 0x4, fixed_abs, tag = 'smem constant byte address 0x4 - core index']
  #allocation1 [shape = 'u32[72,128]{1,0:T(1,128)}', space=vmem, size = 0x9000, scoped, tag = 'internal scratch']
  %s0 = inlined_call_operand.vmem [shape: f32[2,4,16,16], index: 0, kind: input, shape index: {}]
  %s1 = inlined_call_operand.vmem [shape: f32[2,2,16,64], index: 1, kind: input, shape index: {}]
  %s2 = inlined_call_operand.vmem [shape: f32[2,4], index: 2, kind: input, shape index: {}]
  %s3 = inlined_call_operand.vmem [shape: f32[2,1], index: 3, kind: input, shape index: {}]
  %s4 = inlined_call_operand.vmem [shape: f32[16,32], index: 4, kind: input, shape index: {}]
  %s5 = inlined_call_operand.vmem [shape: f32[2,4,16,64], index: 5, kind: output, shape index: {}]
  %s6 = sld [smem:[#allocation0]]
  $region53: #{upsampling_forward.1} parent=0
    _
  %s8 = ssub.s32 1, %s6
  %s9 = scalar_select 0, %s8, %s6
  loop: start=0, step=1, limit=4
  $region2: #{upsampling_forward.1} parent=0 // loop_pre_header
    _
  $region3: #{upsampling_forward.1} parent=0 // loop_header
    %s11 = sphi 0, %s15
    %p12 = scmp.ge.s32.totalorder %s11, 4
    %s18 = sphi 0, %s30
    %s19 = sphi 0, %s26
    %s20 = sphi 0, %s18
    %s21 = sphi 0, %s19
    %s22 = sphi 0, %s20
    %s23 = sphi 0, %s21
    %s35 = sphi 0, %s37
    %s38 = sphi 0, %s35
    %s39 = sphi 0, %s38
    %s55 = sphi 0, %s39
    %s63 = sphi 0, %s65
    %s66 = sphi 0, %s63
    %s67 = sphi 0, %s66
    %s83 = sphi 0, %s67
    %s87 = sphi 0, %s87
    %s89 = sphi 0, %s87
    %s90 = sphi 0, %s89
    %s104 = sphi 0, %s90
    %s108 = sphi 0, %s108
    %s110 = sphi 0, %s108
    %s111 = sphi 0, %s110
    %s125 = sphi 0, %s111
    %s129 = sphi 0, %s129
    %s131 = sphi 0, %s129
    %s132 = sphi 0, %s131
    %s146 = sphi 0, %s132
    %s154 = sphi 0, %s156
    %s157 = sphi 0, %s154
    %s158 = sphi 0, %s157
    %s174 = sphi 0, %s158
  $region4: #{upsampling_forward.1} parent=0 // loop_header_branch
    %14 = sbr.rel (%p12) target = $region8
  $region5: #{upsampling_forward.1} parent=0 // loop_body
    %s16 = ssub.s32 %s11, 1
    %s17 = ssub.s32 %s11, 2
    %s24 = sadd.s32 1, %s19
    %p25 = scmp.ge.s32.totalorder %s24, 1
    %s26 = scalar_select %p25, 0, %s24
    %s27 = sadd.s32 1, %s18
    %s28 = scalar_select %p25, %s27, %s18
    %p29 = scmp.ge.s32.totalorder %s28, 2
    %s30 = scalar_select %p29, 0, %s28
    %s31 = ssub.s32 %s18, %s30
    %s32 = ssub.s32 %s19, %s26
    %s33 = sor.u32 %s31, %s32
    %p34 = scmp.eq.s32.totalorder %s33, 0
    %s36 = sadd.s32 %s35, 1
    %s37 = scalar_select %p34, %s35, %s36
    %p40 = pneg %p34
    %p41 = scmp.eq.s32.totalorder %s11, 1
    %p42 = por %p40, %p41
    %p43 = scmp.ne.s32.totalorder %s35, %s38
    %p44 = scmp.eq.s32.totalorder %s11, 0
    %p45 = por %p43, %p44
    %p46 = scmp.ne.s32.totalorder %s35, %s38
    %p47 = scmp.eq.s32.totalorder %s16, 1
    %p48 = por %p46, %p47
    %p49 = scmp.ne.s32.totalorder %s38, %s39
    %p50 = scmp.eq.s32.totalorder %s16, 0
    %p51 = por %p49, %p50
    %p52 = scmp.ne.s32.totalorder %s38, %s39
    %p53 = scmp.eq.s32.totalorder %s17, 1
    %p54 = por %p52, %p53
    %p56 = scmp.ne.s32.totalorder %s39, %s55
    %p57 = scmp.eq.s32.totalorder %s17, 0
    %p58 = por %p56, %p57
    %s59 = ssub.s32 %s18, %s30
    %s60 = ssub.s32 %s19, %s26
    %s61 = sor.u32 %s59, %s60
    %p62 = scmp.eq.s32.totalorder %s61, 0
    %s64 = sadd.s32 %s63, 1
    %s65 = scalar_select %p62, %s63, %s64
    %p68 = pneg %p62
    %p69 = scmp.eq.s32.totalorder %s11, 1
    %p70 = por %p68, %p69
    %p71 = scmp.ne.s32.totalorder %s63, %s66
    %p72 = scmp.eq.s32.totalorder %s11, 0
    %p73 = por %p71, %p72
    %p74 = scmp.ne.s32.totalorder %s63, %s66
    %p75 = scmp.eq.s32.totalorder %s16, 1
    %p76 = por %p74, %p75
    %p77 = scmp.ne.s32.totalorder %s66, %s67
    %p78 = scmp.eq.s32.totalorder %s16, 0
    %p79 = por %p77, %p78
    %p80 = scmp.ne.s32.totalorder %s66, %s67
    %p81 = scmp.eq.s32.totalorder %s17, 1
    %p82 = por %p80, %p81
    %p84 = scmp.ne.s32.totalorder %s67, %s83
    %p85 = scmp.eq.s32.totalorder %s17, 0
    %p86 = por %p84, %p85
    %s88 = sadd.s32 %s87, 1
    %p91 = scmp.eq.s32.totalorder %s11, 1
    %p92 = scmp.ne.s32.totalorder %s87, %s89
    %p93 = scmp.eq.s32.totalorder %s11, 0
    %p94 = por %p92, %p93
    %p95 = scmp.ne.s32.totalorder %s87, %s89
    %p96 = scmp.eq.s32.totalorder %s16, 1
    %p97 = por %p95, %p96
    %p98 = scmp.ne.s32.totalorder %s89, %s90
    %p99 = scmp.eq.s32.totalorder %s16, 0
    %p100 = por %p98, %p99
    %p101 = scmp.ne.s32.totalorder %s89, %s90
    %p102 = scmp.eq.s32.totalorder %s17, 1
    %p103 = por %p101, %p102
    %p105 = scmp.ne.s32.totalorder %s90, %s104
    %p106 = scmp.eq.s32.totalorder %s17, 0
    %p107 = por %p105, %p106
    %s109 = sadd.s32 %s108, 1
    %p112 = scmp.eq.s32.totalorder %s11, 1
    %p113 = scmp.ne.s32.totalorder %s108, %s110
    %p114 = scmp.eq.s32.totalorder %s11, 0
    %p115 = por %p113, %p114
    %p116 = scmp.ne.s32.totalorder %s108, %s110
    %p117 = scmp.eq.s32.totalorder %s16, 1
    %p118 = por %p116, %p117
    %p119 = scmp.ne.s32.totalorder %s110, %s111
    %p120 = scmp.eq.s32.totalorder %s16, 0
    %p121 = por %p119, %p120
    %p122 = scmp.ne.s32.totalorder %s110, %s111
    %p123 = scmp.eq.s32.totalorder %s17, 1
    %p124 = por %p122, %p123
    %p126 = scmp.ne.s32.totalorder %s111, %s125
    %p127 = scmp.eq.s32.totalorder %s17, 0
    %p128 = por %p126, %p127
    %s130 = sadd.s32 %s129, 1
    %p133 = scmp.eq.s32.totalorder %s11, 1
    %p134 = scmp.ne.s32.totalorder %s129, %s131
    %p135 = scmp.eq.s32.totalorder %s11, 0
    %p136 = por %p134, %p135
    %p137 = scmp.ne.s32.totalorder %s129, %s131
    %p138 = scmp.eq.s32.totalorder %s16, 1
    %p139 = por %p137, %p138
    %p140 = scmp.ne.s32.totalorder %s131, %s132
    %p141 = scmp.eq.s32.totalorder %s16, 0
    %p142 = por %p140, %p141
    %p143 = scmp.ne.s32.totalorder %s131, %s132
    %p144 = scmp.eq.s32.totalorder %s17, 1
    %p145 = por %p143, %p144
    %p147 = scmp.ne.s32.totalorder %s132, %s146
    %p148 = scmp.eq.s32.totalorder %s17, 0
    %p149 = por %p147, %p148
    %s150 = ssub.s32 %s18, %s30
    %s151 = ssub.s32 %s19, %s26
    %s152 = sor.u32 %s150, %s151
    %p153 = scmp.eq.s32.totalorder %s152, 0
    %s155 = sadd.s32 %s154, 1
    %s156 = scalar_select %p153, %s154, %s155
    %p159 = pneg %p153
    %p160 = scmp.eq.s32.totalorder %s11, 1
    %p161 = por %p159, %p160
    %p162 = scmp.ne.s32.totalorder %s154, %s157
    %p163 = scmp.eq.s32.totalorder %s11, 0
    %p164 = por %p162, %p163
    %p165 = scmp.ne.s32.totalorder %s154, %s157
    %p166 = scmp.eq.s32.totalorder %s16, 1
    %p167 = por %p165, %p166
    %p168 = scmp.ne.s32.totalorder %s157, %s158
    %p169 = scmp.eq.s32.totalorder %s16, 0
    %p170 = por %p168, %p169
    %p171 = scmp.ne.s32.totalorder %s157, %s158
    %p172 = scmp.eq.s32.totalorder %s17, 1
    %p173 = por %p171, %p172
    %p175 = scmp.ne.s32.totalorder %s158, %s174
    %p176 = scmp.eq.s32.totalorder %s17, 0
    %p177 = por %p175, %p176
    %p178 = scmp.le.s32.totalorder 1, %s11
    %p179 = scmp.lt.s32.totalorder %s11, 3
    %p180 = pnand %p178, %p179
    %p181 = pneg %p180
    // Predicated region
    $region9: #{upsampling_forward.1} parent=5 // pred_check
      _
    $region10: #{upsampling_forward.1} parent=5 // pred_check_branch
      %183 = sbr.rel (%p180) target = $region12
    $region11: #{upsampling_forward.1} parent=5 // pred_region
      %s184 = ssub.s32 %s11, 1
      // Predicated region
      $region13: #{upsampling_forward.1} parent=11 // pred_check
        %p185 = pneg %p100
      $region14: #{upsampling_forward.1} parent=11 // pred_check_branch
        %187 = sbr.rel (%p185) target = $region16
      $region15: #{upsampling_forward.1} parent=11 // pred_region
        _
      $region16: #{upsampling_forward.1} parent=11 // pred_fallthru
        _
      // Predicated region
      $region17: #{upsampling_forward.1} parent=11 // pred_check
        %p188 = pneg %p121
      $region18: #{upsampling_forward.1} parent=11 // pred_check_branch
        %190 = sbr.rel (%p188) target = $region20
      $region19: #{upsampling_forward.1} parent=11 // pred_region
        _
      $region20: #{upsampling_forward.1} parent=11 // pred_fallthru
        _
      // Predicated region
      $region21: #{upsampling_forward.1} parent=11 // pred_check
        %p191 = pneg %p142
      $region22: #{upsampling_forward.1} parent=11 // pred_check_branch
        %193 = sbr.rel (%p191) target = $region24
      $region23: #{upsampling_forward.1} parent=11 // pred_region
        _
      $region24: #{upsampling_forward.1} parent=11 // pred_fallthru
        _
    $region12: #{upsampling_forward.1} parent=5 // pred_fallthru
      _
    %p194 = scmp.lt.s32.totalorder %s11, 2
    // Predicated region
    $region25: #{upsampling_forward.1} parent=5 // pred_check
      %p195 = pneg %p194
    $region26: #{upsampling_forward.1} parent=5 // pred_check_branch
      %197 = sbr.rel (%p195) target = $region28
    $region27: #{upsampling_forward.1} parent=5 // pred_region
      // Predicated region
      $region29: #{upsampling_forward.1} parent=27 // pred_check
        %p198 = pneg %p45
      $region30: #{upsampling_forward.1} parent=27 // pred_check_branch
        %200 = sbr.rel (%p198) target = $region32
      $region31: #{upsampling_forward.1} parent=27 // pred_region
        %s201 = smul.u32 2, %s19
        %p202 = scmp.lt.s32.totalorder %s18, 1
        %s203 = scalar_select %p202, %s18, 1
        %p204 = scmp.lt.s32.totalorder %s201, 1
        %s205 = scalar_select %p204, %s201, 1
        %s206 = smul.addr %s203, 8
        %s207 = sadd.s32 %s205, %s206
        %s208 = smul.addr %s207, 8
        %s209 = scalar_lea.vmem %s0, %s208
        %s210 = smul.u32 2, %s19
      $region32: #{upsampling_forward.1} parent=27 // pred_fallthru
        _
      // Predicated region
      $region33: #{upsampling_forward.1} parent=27 // pred_check
        %p211 = pneg %p73
      $region34: #{upsampling_forward.1} parent=27 // pred_check_branch
        %213 = sbr.rel (%p211) target = $region36
      $region35: #{upsampling_forward.1} parent=27 // pred_region
        %s214 = smul.u32 2, %s19
        %p215 = scmp.lt.s32.totalorder %s18, 1
        %s216 = scalar_select %p215, %s18, 1
        %p217 = scmp.lt.s32.totalorder %s214, 1
        %s218 = scalar_select %p217, %s214, 1
        %s219 = smul.addr %s216, 4
        %s220 = sadd.s32 %s218, %s219
        %s221 = smul.addr %s220, 8
        %s222 = scalar_lea.vmem %s1, %s221
        %s223 = smul.u32 2, %s19
      $region36: #{upsampling_forward.1} parent=27 // pred_fallthru
        _
    $region28: #{upsampling_forward.1} parent=5 // pred_fallthru
      _
    %p224 = scmp.le.s32.totalorder 1, %s11
    %p225 = scmp.lt.s32.totalorder %s11, 3
    %p226 = pnand %p224, %p225
    %p227 = pneg %p226
    // Predicated region
    $region37: #{upsampling_forward.1} parent=5 // pred_check
      _
    $region38: #{upsampling_forward.1} parent=5 // pred_check_branch
      %229 = sbr.rel (%p226) target = $region40
    $region39: #{upsampling_forward.1} parent=5 // pred_region
      %s230 = ssub.s32 %s11, 1
      %s231 = smul.u32 2, %s21
      %p232 = scmp.lt.s32.totalorder %s20, 1
      %s233 = scalar_select %p232, %s20, 1
      %p234 = scmp.lt.s32.totalorder %s231, 1
      %s235 = scalar_select %p234, %s231, 1
      %s236 = smul.addr %s233, 8
      %s237 = sadd.s32 %s235, %s236
      %s238 = smul.addr %s237, 8
      %s239 = scalar_lea.vmem %s0, %s238
      %p240 = pneg %p51
      %p241 = pneg %p48
      %s242 = smul.u32 2, %s21
      %p243 = scmp.lt.s32.totalorder %s20, 1
      %s244 = scalar_select %p243, %s20, 1
      %p245 = scmp.lt.s32.totalorder %s242, 1
      %s246 = scalar_select %p245, %s242, 1
      %s247 = smul.addr %s244, 4
      %s248 = sadd.s32 %s246, %s247
      %s249 = smul.addr %s248, 8
      %s250 = scalar_lea.vmem %s1, %s249
      %p251 = pneg %p79
      %p252 = pneg %p76
      %p253 = pneg %p100
      %p254 = pneg %p97
      %p255 = pneg %p121
      %p256 = pneg %p118
      %p257 = pneg %p142
      %p258 = pneg %p139
      %p259 = pneg %p170
      %p260 = pneg %p167
      %s261 = smul.u32 2, %s21
      %p262 = scmp.lt.s32.totalorder %s20, 1
      %s263 = scalar_select %p262, %s20, 1
      %p264 = scmp.lt.s32.totalorder %s261, 1
      %s265 = scalar_select %p264, %s261, 1
      %s266 = smul.addr %s263, 8
      %s267 = sadd.s32 %s265, %s266
      %s268 = smul.addr %s267, 8
      %s269 = scalar_lea.vmem %s5, %s268
      %s270 = smul.u32 2, %s21
      %p271 = scmp.lt.s32.totalorder %s20, 1
      %s272 = scalar_select %p271, %s20, 1
      %p273 = scmp.lt.s32.totalorder %s270, 1
      %s274 = scalar_select %p273, %s270, 1
      %s275 = smul.addr %s272, 8
      %s276 = sadd.s32 %s274, %s275
      %s277 = smul.addr %s276, 8
      %s278 = scalar_lea.vmem %s0, %s277
      %s279 = smul.u32 2, %s21
      %s280 = smul.u32 2, %s21
      %p281 = scmp.lt.s32.totalorder %s20, 1
      %s282 = scalar_select %p281, %s20, 1
      %p283 = scmp.lt.s32.totalorder %s280, 1
      %s284 = scalar_select %p283, %s280, 1
      %s285 = smul.addr %s282, 4
      %s286 = sadd.s32 %s284, %s285
      %s287 = smul.addr %s286, 8
      %s288 = scalar_lea.vmem %s1, %s287
      %s289 = smul.u32 2, %s21
      %s290 = smul.u32 2, %s21
      %p291 = scmp.lt.s32.totalorder %s20, 1
      %s292 = scalar_select %p291, %s20, 1
      %p293 = scmp.lt.s32.totalorder %s290, 1
      %s294 = scalar_select %p293, %s290, 1
      %s295 = smul.addr %s292, 8
      %s296 = sadd.s32 %s294, %s295
      %s297 = smul.addr %s296, 8
      %s298 = scalar_lea.vmem %s5, %s297
      %s299 = smul.u32 2, %s21
      %v300 = vld [vmem:[%s2] sm:$0x3]
      %v301 = vld [vmem:[%s3] sm:$0x3]
      %v302 = vld [vmem:[%s4] sm:$0xff]
      %v303 = vld [vmem:[%s4 + $0x8] sm:$0xff]
      %v304 = vld [vmem:[%s288] sm:$0xff]
      %v305 = vld [vmem:[%s288 + $0x8] sm:$0xff]
      %v306 = vld [vmem:[%s288 + $0x10] sm:$0xff]
      %v307 = vld [vmem:[%s288 + $0x18] sm:$0xff]
      %s308 = scalar_lea.vmem %s298, 32
      %vm309 = vcmask 523264
      %310 = vst.msk [vmem:[%s308] sm:$0xff] %vm309, %v304
      %311 = vst.msk [vmem:[%s308 + $0x8] sm:$0xff] %vm309, %v305
      %312 = vst.msk [vmem:[%s308 + $0x10] sm:$0xff] %vm309, %v306
      %313 = vst.msk [vmem:[%s308 + $0x18] sm:$0xff] %vm309, %v307
      %v314 = vld [vmem:[%s278] sm:$0x1]
      %v315 = vld [vmem:[%s278 + $0x10] sm:$0x1]
      %v316 = vld [vmem:[%s278 + $0x20] sm:$0x1]
      %v317 = vld [vmem:[%s278 + $0x30] sm:$0x1]
      %319 = vset.pattern.permute.xlu0 0
      %320 = vperm.xlu0 %319, %v301
      %v321 = vpop.permute.xlu0 %320
      %v327 = vrot.slane %v315, 7
      %vm328 = vcmask 1041409
      %v329 = vsel %vm328, %v327, %v314
      %v330 = vrot.slane %v316, 6
      %vm331 = vcmask 1042434
      %v332 = vsel %vm331, %v330, %v329
      %v333 = vrot.slane %v317, 5
      %vm334 = vcmask 1043459
      %v335 = vsel %vm334, %v333, %v332
      %vm336 = vcmask 31744
      %v338 = vsel %vm336, %v300, 0
      %vm340 = vcmask 1043456
      %v341 = vsel %vm340, %v335, 0
      %343 = vmatpush.msra.mxu0 0.0
      %344 = vmatpush.msra.mxu0 0.0
      %345 = vmatpush.msra.mxu0 0.0
      %346 = vmatpush.msra.mxu0 0.0
      %347 = vmatpush.msra.mxu0 0.0
      %348 = vmatpush.msra.mxu0 0.0
      %349 = vmatpush.msra.mxu0 0.0
      %350 = vmatpush.msra.mxu0 0.0
      %351 = vmatpush.msra.mxu0 0.0
      %352 = vmatpush.msra.mxu0 0.0
      %353 = vmatpush.msra.mxu0 0.0
      %354 = vmatpush.msra.mxu0 0.0
      %355 = vmatpush.msra.mxu0 0.0
      %356 = vmatpush.msra.mxu0 0.0
      %357 = vmatpush.msra.mxu0 0.0
      %358 = vmatpush.msra.mxu0 %v341
      %359 = vmatmul.f32.gmra.mxu0 %v338
      %v360 = vpop.f32.mrf.mxu0
      %v361 = vadd.f32 %v321, %v360
      %362 = vdwg.mxu0
      %vm363 = vcmask 130048
      %v365 = vsel %vm363, %v361, 0
      %367 = vmatpush.msra.mxu0 0.0
      %368 = vmatpush.msra.mxu0 0.0
      %369 = vmatpush.msra.mxu0 0.0
      %370 = vmatpush.msra.mxu0 0.0
      %371 = vmatpush.msra.mxu0 0.0
      %372 = vmatpush.msra.mxu0 0.0
      %373 = vmatpush.msra.mxu0 0.0
      %374 = vmatpush.msra.mxu0 0.0
      %375 = vmatpush.msra.mxu0 0.0
      %376 = vmatpush.msra.mxu0 0.0
      %377 = vmatpush.msra.mxu0 0.0
      %378 = vmatpush.msra.mxu0 0.0
      %379 = vmatpush.msra.mxu0 0.0
      %380 = vmatpush.msra.mxu0 0.0
      %381 = vmatpush.msra.mxu0 %v303
      %382 = vmatpush.msra.mxu0 %v302
      %383 = vmatmul.f32.gmra.mxu0 %v365
      %v384 = vpop.f32.mrf.mxu0
      %v385 = vadd.f32 0.0, %v384
      %386 = vdwg.mxu0
      %v388 = vrot.slane %v385, 1
      %vm390 = vcmask 253952
      %391 = vst.msk [vmem:[%s298] sm:$0x1] %vm390, %v385
      %392 = vst.msk [vmem:[%s298 + $0x10] sm:$0x1] %vm390, %v388
      %v393 = vperm.slane %v385, 0
      %v394 = vperm.slane %v388, 0
      %395 = vrot.lane.b32.xlu0 %v393, 32
      %v396 = vpop.permute.xlu0 %395
      %397 = vrot.lane.b32.xlu0 %v394, 32
      %v398 = vpop.permute.xlu0 %397
      %vm401 = vcmask 516352
      %402 = vst.msk [vmem:[%s298] sm:$0x1] %vm401, %v396
      %403 = vst.msk [vmem:[%s298 + $0x10] sm:$0x1] %vm401, %v398
      %v404 = vld [vmem:[%s278 + $0x1] sm:$0x1]
      %v405 = vld [vmem:[%s278 + $0x11] sm:$0x1]
      %v406 = vld [vmem:[%s278 + $0x21] sm:$0x1]
      %v407 = vld [vmem:[%s278 + $0x31] sm:$0x1]
      %v412 = vrot.slane %v405, 7
      %v413 = vsel %vm328, %v412, %v404
      %v414 = vrot.slane %v406, 6
      %v415 = vsel %vm331, %v414, %v413
      %v416 = vrot.slane %v407, 5
      %v417 = vsel %vm334, %v416, %v415
      %v418 = vsel %vm340, %v417, 0
      %420 = vmatpush.msra.mxu0 0.0
      %421 = vmatpush.msra.mxu0 0.0
      %422 = vmatpush.msra.mxu0 0.0
      %423 = vmatpush.msra.mxu0 0.0
      %424 = vmatpush.msra.mxu0 0.0
      %425 = vmatpush.msra.mxu0 0.0
      %426 = vmatpush.msra.mxu0 0.0
      %427 = vmatpush.msra.mxu0 0.0
      %428 = vmatpush.msra.mxu0 0.0
      %429 = vmatpush.msra.mxu0 0.0
      %430 = vmatpush.msra.mxu0 0.0
      %431 = vmatpush.msra.mxu0 0.0
      %432 = vmatpush.msra.mxu0 0.0
      %433 = vmatpush.msra.mxu0 0.0
      %434 = vmatpush.msra.mxu0 0.0
      %435 = vmatpush.msra.mxu0 %v418
      %436 = vmatmul.f32.gmra.mxu0 %v338
      %v437 = vpop.f32.mrf.mxu0
      %v438 = vadd.f32 %v321, %v437
      %439 = vdwg.mxu0
      %v441 = vsel %vm363, %v438, 0
      %443 = vmatpush.msra.mxu0 0.0
      %444 = vmatpush.msra.mxu0 0.0
      %445 = vmatpush.msra.mxu0 0.0
      %446 = vmatpush.msra.mxu0 0.0
      %447 = vmatpush.msra.mxu0 0.0
      %448 = vmatpush.msra.mxu0 0.0
      %449 = vmatpush.msra.mxu0 0.0
      %450 = vmatpush.msra.mxu0 0.0
      %451 = vmatpush.msra.mxu0 0.0
      %452 = vmatpush.msra.mxu0 0.0
      %453 = vmatpush.msra.mxu0 0.0
      %454 = vmatpush.msra.mxu0 0.0
      %455 = vmatpush.msra.mxu0 0.0
      %456 = vmatpush.msra.mxu0 0.0
      %457 = vmatpush.msra.mxu0 %v303
      %458 = vmatpush.msra.mxu0 %v302
      %459 = vmatmul.f32.gmra.mxu0 %v441
      %v460 = vpop.f32.mrf.mxu0
      %v461 = vadd.f32 0.0, %v460
      %462 = vdwg.mxu0
      %v464 = vrot.slane %v461, 1
      %466 = vst.msk [vmem:[%s298 + $0x1] sm:$0x1] %vm390, %v461
      %467 = vst.msk [vmem:[%s298 + $0x11] sm:$0x1] %vm390, %v464
      %v468 = vperm.slane %v461, 0
      %v469 = vperm.slane %v464, 0
      %470 = vrot.lane.b32.xlu0 %v468, 32
      %v471 = vpop.permute.xlu0 %470
      %472 = vrot.lane.b32.xlu0 %v469, 32
      %v473 = vpop.permute.xlu0 %472
      %476 = vst.msk [vmem:[%s298 + $0x1] sm:$0x1] %vm401, %v471
      %477 = vst.msk [vmem:[%s298 + $0x11] sm:$0x1] %vm401, %v473
      %v478 = vld [vmem:[%s278 + $0x2] sm:$0x1]
      %v479 = vld [vmem:[%s278 + $0x12] sm:$0x1]
      %v480 = vld [vmem:[%s278 + $0x22] sm:$0x1]
      %v481 = vld [vmem:[%s278 + $0x32] sm:$0x1]
      %v486 = vrot.slane %v479, 7
      %v487 = vsel %vm328, %v486, %v478
      %v488 = vrot.slane %v480, 6
      %v489 = vsel %vm331, %v488, %v487
      %v490 = vrot.slane %v481, 5
      %v491 = vsel %vm334, %v490, %v489
      %v492 = vsel %vm340, %v491, 0
      %494 = vmatpush.msra.mxu0 0.0
      %495 = vmatpush.msra.mxu0 0.0
      %496 = vmatpush.msra.mxu0 0.0
      %497 = vmatpush.msra.mxu0 0.0
      %498 = vmatpush.msra.mxu0 0.0
      %499 = vmatpush.msra.mxu0 0.0
      %500 = vmatpush.msra.mxu0 0.0
      %501 = vmatpush.msra.mxu0 0.0
      %502 = vmatpush.msra.mxu0 0.0
      %503 = vmatpush.msra.mxu0 0.0
      %504 = vmatpush.msra.mxu0 0.0
      %505 = vmatpush.msra.mxu0 0.0
      %506 = vmatpush.msra.mxu0 0.0
      %507 = vmatpush.msra.mxu0 0.0
      %508 = vmatpush.msra.mxu0 0.0
      %509 = vmatpush.msra.mxu0 %v492
      %510 = vmatmul.f32.gmra.mxu0 %v338
      %v511 = vpop.f32.mrf.mxu0
      %v512 = vadd.f32 %v321, %v511
      %513 = vdwg.mxu0
      %v515 = vsel %vm363, %v512, 0
      %517 = vmatpush.msra.mxu0 0.0
      %518 = vmatpush.msra.mxu0 0.0
      %519 = vmatpush.msra.mxu0 0.0
      %520 = vmatpush.msra.mxu0 0.0
      %521 = vmatpush.msra.mxu0 0.0
      %522 = vmatpush.msra.mxu0 0.0
      %523 = vmatpush.msra.mxu0 0.0
      %524 = vmatpush.msra.mxu0 0.0
      %525 = vmatpush.msra.mxu0 0.0
      %526 = vmatpush.msra.mxu0 0.0
      %527 = vmatpush.msra.mxu0 0.0
      %528 = vmatpush.msra.mxu0 0.0
      %529 = vmatpush.msra.mxu0 0.0
      %530 = vmatpush.msra.mxu0 0.0
      %531 = vmatpush.msra.mxu0 %v303
      %532 = vmatpush.msra.mxu0 %v302
      %533 = vmatmul.f32.gmra.mxu0 %v515
      %v534 = vpop.f32.mrf.mxu0
      %v535 = vadd.f32 0.0, %v534
      %536 = vdwg.mxu0
      %v538 = vrot.slane %v535, 1
      %540 = vst.msk [vmem:[%s298 + $0x2] sm:$0x1] %vm390, %v535
      %541 = vst.msk [vmem:[%s298 + $0x12] sm:$0x1] %vm390, %v538
      %v542 = vperm.slane %v535, 0
      %v543 = vperm.slane %v538, 0
      %544 = vrot.lane.b32.xlu0 %v542, 32
      %v545 = vpop.permute.xlu0 %544
      %546 = vrot.lane.b32.xlu0 %v543, 32
      %v547 = vpop.permute.xlu0 %546
      %550 = vst.msk [vmem:[%s298 + $0x2] sm:$0x1] %vm401, %v545
      %551 = vst.msk [vmem:[%s298 + $0x12] sm:$0x1] %vm401, %v547
      %v552 = vld [vmem:[%s278 + $0x3] sm:$0x1]
      %v553 = vld [vmem:[%s278 + $0x13] sm:$0x1]
      %v554 = vld [vmem:[%s278 + $0x23] sm:$0x1]
      %v555 = vld [vmem:[%s278 + $0x33] sm:$0x1]
      %v560 = vrot.slane %v553, 7
      %v561 = vsel %vm328, %v560, %v552
      %v562 = vrot.slane %v554, 6
      %v563 = vsel %vm331, %v562, %v561
      %v564 = vrot.slane %v555, 5
      %v565 = vsel %vm334, %v564, %v563
      %v566 = vsel %vm340, %v565, 0
      %568 = vmatpush.msra.mxu0 0.0
      %569 = vmatpush.msra.mxu0 0.0
      %570 = vmatpush.msra.mxu0 0.0
      %571 = vmatpush.msra.mxu0 0.0
      %572 = vmatpush.msra.mxu0 0.0
      %573 = vmatpush.msra.mxu0 0.0
      %574 = vmatpush.msra.mxu0 0.0
      %575 = vmatpush.msra.mxu0 0.0
      %576 = vmatpush.msra.mxu0 0.0
      %577 = vmatpush.msra.mxu0 0.0
      %578 = vmatpush.msra.mxu0 0.0
      %579 = vmatpush.msra.mxu0 0.0
      %580 = vmatpush.msra.mxu0 0.0
      %581 = vmatpush.msra.mxu0 0.0
      %582 = vmatpush.msra.mxu0 0.0
      %583 = vmatpush.msra.mxu0 %v566
      %584 = vmatmul.f32.gmra.mxu0 %v338
      %v585 = vpop.f32.mrf.mxu0
      %v586 = vadd.f32 %v321, %v585
      %587 = vdwg.mxu0
      %v589 = vsel %vm363, %v586, 0
      %591 = vmatpush.msra.mxu0 0.0
      %592 = vmatpush.msra.mxu0 0.0
      %593 = vmatpush.msra.mxu0 0.0
      %594 = vmatpush.msra.mxu0 0.0
      %595 = vmatpush.msra.mxu0 0.0
      %596 = vmatpush.msra.mxu0 0.0
      %597 = vmatpush.msra.mxu0 0.0
      %598 = vmatpush.msra.mxu0 0.0
      %599 = vmatpush.msra.mxu0 0.0
      %600 = vmatpush.msra.mxu0 0.0
      %601 = vmatpush.msra.mxu0 0.0
      %602 = vmatpush.msra.mxu0 0.0
      %603 = vmatpush.msra.mxu0 0.0
      %604 = vmatpush.msra.mxu0 0.0
      %605 = vmatpush.msra.mxu0 %v303
      %606 = vmatpush.msra.mxu0 %v302
      %607 = vmatmul.f32.gmra.mxu0 %v589
      %v608 = vpop.f32.mrf.mxu0
      %v609 = vadd.f32 0.0, %v608
      %610 = vdwg.mxu0
      %v612 = vrot.slane %v609, 1
      %614 = vst.msk [vmem:[%s298 + $0x3] sm:$0x1] %vm390, %v609
      %615 = vst.msk [vmem:[%s298 + $0x13] sm:$0x1] %vm390, %v612
      %v616 = vperm.slane %v609, 0
      %v617 = vperm.slane %v612, 0
      %618 = vrot.lane.b32.xlu0 %v616, 32
      %v619 = vpop.permute.xlu0 %618
      %620 = vrot.lane.b32.xlu0 %v617, 32
      %v621 = vpop.permute.xlu0 %620
      %624 = vst.msk [vmem:[%s298 + $0x3] sm:$0x1] %vm401, %v619
      %625 = vst.msk [vmem:[%s298 + $0x13] sm:$0x1] %vm401, %v621
      %v626 = vld [vmem:[%s278 + $0x4] sm:$0x1]
      %v627 = vld [vmem:[%s278 + $0x14] sm:$0x1]
      %v628 = vld [vmem:[%s278 + $0x24] sm:$0x1]
      %v629 = vld [vmem:[%s278 + $0x34] sm:$0x1]
      %v634 = vrot.slane %v627, 7
      %v635 = vsel %vm328, %v634, %v626
      %v636 = vrot.slane %v628, 6
      %v637 = vsel %vm331, %v636, %v635
      %v638 = vrot.slane %v629, 5
      %v639 = vsel %vm334, %v638, %v637
      %v640 = vsel %vm340, %v639, 0
      %642 = vmatpush.msra.mxu0 0.0
      %643 = vmatpush.msra.mxu0 0.0
      %644 = vmatpush.msra.mxu0 0.0
      %645 = vmatpush.msra.mxu0 0.0
      %646 = vmatpush.msra.mxu0 0.0
      %647 = vmatpush.msra.mxu0 0.0
      %648 = vmatpush.msra.mxu0 0.0
      %649 = vmatpush.msra.mxu0 0.0
      %650 = vmatpush.msra.mxu0 0.0
      %651 = vmatpush.msra.mxu0 0.0
      %652 = vmatpush.msra.mxu0 0.0
      %653 = vmatpush.msra.mxu0 0.0
      %654 = vmatpush.msra.mxu0 0.0
      %655 = vmatpush.msra.mxu0 0.0
      %656 = vmatpush.msra.mxu0 0.0
      %657 = vmatpush.msra.mxu0 %v640
      %658 = vmatmul.f32.gmra.mxu0 %v338
      %v659 = vpop.f32.mrf.mxu0
      %v660 = vadd.f32 %v321, %v659
      %661 = vdwg.mxu0
      %v663 = vsel %vm363, %v660, 0
      %665 = vmatpush.msra.mxu0 0.0
      %666 = vmatpush.msra.mxu0 0.0
      %667 = vmatpush.msra.mxu0 0.0
      %668 = vmatpush.msra.mxu0 0.0
      %669 = vmatpush.msra.mxu0 0.0
      %670 = vmatpush.msra.mxu0 0.0
      %671 = vmatpush.msra.mxu0 0.0
      %672 = vmatpush.msra.mxu0 0.0
      %673 = vmatpush.msra.mxu0 0.0
      %674 = vmatpush.msra.mxu0 0.0
      %675 = vmatpush.msra.mxu0 0.0
      %676 = vmatpush.msra.mxu0 0.0
      %677 = vmatpush.msra.mxu0 0.0
      %678 = vmatpush.msra.mxu0 0.0
      %679 = vmatpush.msra.mxu0 %v303
      %680 = vmatpush.msra.mxu0 %v302
      %681 = vmatmul.f32.gmra.mxu0 %v663
      %v682 = vpop.f32.mrf.mxu0
      %v683 = vadd.f32 0.0, %v682
      %684 = vdwg.mxu0
      %v686 = vrot.slane %v683, 1
      %688 = vst.msk [vmem:[%s298 + $0x4] sm:$0x1] %vm390, %v683
      %689 = vst.msk [vmem:[%s298 + $0x14] sm:$0x1] %vm390, %v686
      %v690 = vperm.slane %v683, 0
      %v691 = vperm.slane %v686, 0
      %692 = vrot.lane.b32.xlu0 %v690, 32
      %v693 = vpop.permute.xlu0 %692
      %694 = vrot.lane.b32.xlu0 %v691, 32
      %v695 = vpop.permute.xlu0 %694
      %698 = vst.msk [vmem:[%s298 + $0x4] sm:$0x1] %vm401, %v693
      %699 = vst.msk [vmem:[%s298 + $0x14] sm:$0x1] %vm401, %v695
      %v700 = vld [vmem:[%s278 + $0x5] sm:$0x1]
      %v701 = vld [vmem:[%s278 + $0x15] sm:$0x1]
      %v702 = vld [vmem:[%s278 + $0x25] sm:$0x1]
      %v703 = vld [vmem:[%s278 + $0x35] sm:$0x1]
      %v708 = vrot.slane %v701, 7
      %v709 = vsel %vm328, %v708, %v700
      %v710 = vrot.slane %v702, 6
      %v711 = vsel %vm331, %v710, %v709
      %v712 = vrot.slane %v703, 5
      %v713 = vsel %vm334, %v712, %v711
      %v714 = vsel %vm340, %v713, 0
      %716 = vmatpush.msra.mxu0 0.0
      %717 = vmatpush.msra.mxu0 0.0
      %718 = vmatpush.msra.mxu0 0.0
      %719 = vmatpush.msra.mxu0 0.0
      %720 = vmatpush.msra.mxu0 0.0
      %721 = vmatpush.msra.mxu0 0.0
      %722 = vmatpush.msra.mxu0 0.0
      %723 = vmatpush.msra.mxu0 0.0
      %724 = vmatpush.msra.mxu0 0.0
      %725 = vmatpush.msra.mxu0 0.0
      %726 = vmatpush.msra.mxu0 0.0
      %727 = vmatpush.msra.mxu0 0.0
      %728 = vmatpush.msra.mxu0 0.0
      %729 = vmatpush.msra.mxu0 0.0
      %730 = vmatpush.msra.mxu0 0.0
      %731 = vmatpush.msra.mxu0 %v714
      %732 = vmatmul.f32.gmra.mxu0 %v338
      %v733 = vpop.f32.mrf.mxu0
      %v734 = vadd.f32 %v321, %v733
      %735 = vdwg.mxu0
      %v737 = vsel %vm363, %v734, 0
      %739 = vmatpush.msra.mxu0 0.0
      %740 = vmatpush.msra.mxu0 0.0
      %741 = vmatpush.msra.mxu0 0.0
      %742 = vmatpush.msra.mxu0 0.0
      %743 = vmatpush.msra.mxu0 0.0
      %744 = vmatpush.msra.mxu0 0.0
      %745 = vmatpush.msra.mxu0 0.0
      %746 = vmatpush.msra.mxu0 0.0
      %747 = vmatpush.msra.mxu0 0.0
      %748 = vmatpush.msra.mxu0 0.0
      %749 = vmatpush.msra.mxu0 0.0
      %750 = vmatpush.msra.mxu0 0.0
      %751 = vmatpush.msra.mxu0 0.0
      %752 = vmatpush.msra.mxu0 0.0
      %753 = vmatpush.msra.mxu0 %v303
      %754 = vmatpush.msra.mxu0 %v302
      %755 = vmatmul.f32.gmra.mxu0 %v737
      %v756 = vpop.f32.mrf.mxu0
      %v757 = vadd.f32 0.0, %v756
      %758 = vdwg.mxu0
      %v760 = vrot.slane %v757, 1
      %762 = vst.msk [vmem:[%s298 + $0x5] sm:$0x1] %vm390, %v757
      %763 = vst.msk [vmem:[%s298 + $0x15] sm:$0x1] %vm390, %v760
      %v764 = vperm.slane %v757, 0
      %v765 = vperm.slane %v760, 0
      %766 = vrot.lane.b32.xlu0 %v764, 32
      %v767 = vpop.permute.xlu0 %766
      %768 = vrot.lane.b32.xlu0 %v765, 32
      %v769 = vpop.permute.xlu0 %768
      %772 = vst.msk [vmem:[%s298 + $0x5] sm:$0x1] %vm401, %v767
      %773 = vst.msk [vmem:[%s298 + $0x15] sm:$0x1] %vm401, %v769
      %v774 = vld [vmem:[%s278 + $0x6] sm:$0x1]
      %v775 = vld [vmem:[%s278 + $0x16] sm:$0x1]
      %v776 = vld [vmem:[%s278 + $0x26] sm:$0x1]
      %v777 = vld [vmem:[%s278 + $0x36] sm:$0x1]
      %v782 = vrot.slane %v775, 7
      %v783 = vsel %vm328, %v782, %v774
      %v784 = vrot.slane %v776, 6
      %v785 = vsel %vm331, %v784, %v783
      %v786 = vrot.slane %v777, 5
      %v787 = vsel %vm334, %v786, %v785
      %v788 = vsel %vm340, %v787, 0
      %790 = vmatpush.msra.mxu0 0.0
      %791 = vmatpush.msra.mxu0 0.0
      %792 = vmatpush.msra.mxu0 0.0
      %793 = vmatpush.msra.mxu0 0.0
      %794 = vmatpush.msra.mxu0 0.0
      %795 = vmatpush.msra.mxu0 0.0
      %796 = vmatpush.msra.mxu0 0.0
      %797 = vmatpush.msra.mxu0 0.0
      %798 = vmatpush.msra.mxu0 0.0
      %799 = vmatpush.msra.mxu0 0.0
      %800 = vmatpush.msra.mxu0 0.0
      %801 = vmatpush.msra.mxu0 0.0
      %802 = vmatpush.msra.mxu0 0.0
      %803 = vmatpush.msra.mxu0 0.0
      %804 = vmatpush.msra.mxu0 0.0
      %805 = vmatpush.msra.mxu0 %v788
      %806 = vmatmul.f32.gmra.mxu0 %v338
      %v807 = vpop.f32.mrf.mxu0
      %v808 = vadd.f32 %v321, %v807
      %809 = vdwg.mxu0
      %v811 = vsel %vm363, %v808, 0
      %813 = vmatpush.msra.mxu0 0.0
      %814 = vmatpush.msra.mxu0 0.0
      %815 = vmatpush.msra.mxu0 0.0
      %816 = vmatpush.msra.mxu0 0.0
      %817 = vmatpush.msra.mxu0 0.0
      %818 = vmatpush.msra.mxu0 0.0
      %819 = vmatpush.msra.mxu0 0.0
      %820 = vmatpush.msra.mxu0 0.0
      %821 = vmatpush.msra.mxu0 0.0
      %822 = vmatpush.msra.mxu0 0.0
      %823 = vmatpush.msra.mxu0 0.0
      %824 = vmatpush.msra.mxu0 0.0
      %825 = vmatpush.msra.mxu0 0.0
      %826 = vmatpush.msra.mxu0 0.0
      %827 = vmatpush.msra.mxu0 %v303
      %828 = vmatpush.msra.mxu0 %v302
      %829 = vmatmul.f32.gmra.mxu0 %v811
      %v830 = vpop.f32.mrf.mxu0
      %v831 = vadd.f32 0.0, %v830
      %832 = vdwg.mxu0
      %v834 = vrot.slane %v831, 1
      %836 = vst.msk [vmem:[%s298 + $0x6] sm:$0x1] %vm390, %v831
      %837 = vst.msk [vmem:[%s298 + $0x16] sm:$0x1] %vm390, %v834
      %v838 = vperm.slane %v831, 0
      %v839 = vperm.slane %v834, 0
      %840 = vrot.lane.b32.xlu0 %v838, 32
      %v841 = vpop.permute.xlu0 %840
      %842 = vrot.lane.b32.xlu0 %v839, 32
      %v843 = vpop.permute.xlu0 %842
      %846 = vst.msk [vmem:[%s298 + $0x6] sm:$0x1] %vm401, %v841
      %847 = vst.msk [vmem:[%s298 + $0x16] sm:$0x1] %vm401, %v843
      %v848 = vld [vmem:[%s278 + $0x7] sm:$0x1]
      %v849 = vld [vmem:[%s278 + $0x17] sm:$0x1]
      %v850 = vld [vmem:[%s278 + $0x27] sm:$0x1]
      %v851 = vld [vmem:[%s278 + $0x37] sm:$0x1]
      %v856 = vrot.slane %v849, 7
      %v857 = vsel %vm328, %v856, %v848
      %v858 = vrot.slane %v850, 6
      %v859 = vsel %vm331, %v858, %v857
      %v860 = vrot.slane %v851, 5
      %v861 = vsel %vm334, %v860, %v859
      %v862 = vsel %vm340, %v861, 0
      %864 = vmatpush.msra.mxu0 0.0
      %865 = vmatpush.msra.mxu0 0.0
      %866 = vmatpush.msra.mxu0 0.0
      %867 = vmatpush.msra.mxu0 0.0
      %868 = vmatpush.msra.mxu0 0.0
      %869 = vmatpush.msra.mxu0 0.0
      %870 = vmatpush.msra.mxu0 0.0
      %871 = vmatpush.msra.mxu0 0.0
      %872 = vmatpush.msra.mxu0 0.0
      %873 = vmatpush.msra.mxu0 0.0
      %874 = vmatpush.msra.mxu0 0.0
      %875 = vmatpush.msra.mxu0 0.0
      %876 = vmatpush.msra.mxu0 0.0
      %877 = vmatpush.msra.mxu0 0.0
      %878 = vmatpush.msra.mxu0 0.0
      %879 = vmatpush.msra.mxu0 %v862
      %880 = vmatmul.f32.gmra.mxu0 %v338
      %v881 = vpop.f32.mrf.mxu0
      %v882 = vadd.f32 %v321, %v881
      %883 = vdwg.mxu0
      %v885 = vsel %vm363, %v882, 0
      %887 = vmatpush.msra.mxu0 0.0
      %888 = vmatpush.msra.mxu0 0.0
      %889 = vmatpush.msra.mxu0 0.0
      %890 = vmatpush.msra.mxu0 0.0
      %891 = vmatpush.msra.mxu0 0.0
      %892 = vmatpush.msra.mxu0 0.0
      %893 = vmatpush.msra.mxu0 0.0
      %894 = vmatpush.msra.mxu0 0.0
      %895 = vmatpush.msra.mxu0 0.0
      %896 = vmatpush.msra.mxu0 0.0
      %897 = vmatpush.msra.mxu0 0.0
      %898 = vmatpush.msra.mxu0 0.0
      %899 = vmatpush.msra.mxu0 0.0
      %900 = vmatpush.msra.mxu0 0.0
      %901 = vmatpush.msra.mxu0 %v303
      %902 = vmatpush.msra.mxu0 %v302
      %903 = vmatmul.f32.gmra.mxu0 %v885
      %v904 = vpop.f32.mrf.mxu0
      %v905 = vadd.f32 0.0, %v904
      %906 = vdwg.mxu0
      %v908 = vrot.slane %v905, 1
      %910 = vst.msk [vmem:[%s298 + $0x7] sm:$0x1] %vm390, %v905
      %911 = vst.msk [vmem:[%s298 + $0x17] sm:$0x1] %vm390, %v908
      %v912 = vperm.slane %v905, 0
      %v913 = vperm.slane %v908, 0
      %914 = vrot.lane.b32.xlu0 %v912, 32
      %v915 = vpop.permute.xlu0 %914
      %916 = vrot.lane.b32.xlu0 %v913, 32
      %v917 = vpop.permute.xlu0 %916
      %920 = vst.msk [vmem:[%s298 + $0x7] sm:$0x1] %vm401, %v915
      %921 = vst.msk [vmem:[%s298 + $0x17] sm:$0x1] %vm401, %v917
      %v922 = vld [vmem:[%s278 + $0x8] sm:$0x1]
      %v923 = vld [vmem:[%s278 + $0x18] sm:$0x1]
      %v924 = vld [vmem:[%s278 + $0x28] sm:$0x1]
      %v925 = vld [vmem:[%s278 + $0x38] sm:$0x1]
      %v930 = vrot.slane %v923, 7
      %v931 = vsel %vm328, %v930, %v922
      %v932 = vrot.slane %v924, 6
      %v933 = vsel %vm331, %v932, %v931
      %v934 = vrot.slane %v925, 5
      %v935 = vsel %vm334, %v934, %v933
      %v936 = vsel %vm340, %v935, 0
      %938 = vmatpush.msra.mxu0 0.0
      %939 = vmatpush.msra.mxu0 0.0
      %940 = vmatpush.msra.mxu0 0.0
      %941 = vmatpush.msra.mxu0 0.0
      %942 = vmatpush.msra.mxu0 0.0
      %943 = vmatpush.msra.mxu0 0.0
      %944 = vmatpush.msra.mxu0 0.0
      %945 = vmatpush.msra.mxu0 0.0
      %946 = vmatpush.msra.mxu0 0.0
      %947 = vmatpush.msra.mxu0 0.0
      %948 = vmatpush.msra.mxu0 0.0
      %949 = vmatpush.msra.mxu0 0.0
      %950 = vmatpush.msra.mxu0 0.0
      %951 = vmatpush.msra.mxu0 0.0
      %952 = vmatpush.msra.mxu0 0.0
      %953 = vmatpush.msra.mxu0 %v936
      %954 = vmatmul.f32.gmra.mxu0 %v338
      %v955 = vpop.f32.mrf.mxu0
      %v956 = vadd.f32 %v321, %v955
      %957 = vdwg.mxu0
      %v959 = vsel %vm363, %v956, 0
      %961 = vmatpush.msra.mxu0 0.0
      %962 = vmatpush.msra.mxu0 0.0
      %963 = vmatpush.msra.mxu0 0.0
      %964 = vmatpush.msra.mxu0 0.0
      %965 = vmatpush.msra.mxu0 0.0
      %966 = vmatpush.msra.mxu0 0.0
      %967 = vmatpush.msra.mxu0 0.0
      %968 = vmatpush.msra.mxu0 0.0
      %969 = vmatpush.msra.mxu0 0.0
      %970 = vmatpush.msra.mxu0 0.0
      %971 = vmatpush.msra.mxu0 0.0
      %972 = vmatpush.msra.mxu0 0.0
      %973 = vmatpush.msra.mxu0 0.0
      %974 = vmatpush.msra.mxu0 0.0
      %975 = vmatpush.msra.mxu0 %v303
      %976 = vmatpush.msra.mxu0 %v302
      %977 = vmatmul.f32.gmra.mxu0 %v959
      %v978 = vpop.f32.mrf.mxu0
      %v979 = vadd.f32 0.0, %v978
      %980 = vdwg.mxu0
      %v982 = vrot.slane %v979, 1
      %984 = vst.msk [vmem:[%s298 + $0x8] sm:$0x1] %vm390, %v979
      %985 = vst.msk [vmem:[%s298 + $0x18] sm:$0x1] %vm390, %v982
      %v986 = vperm.slane %v979, 0
      %v987 = vperm.slane %v982, 0
      %988 = vrot.lane.b32.xlu0 %v986, 32
      %v989 = vpop.permute.xlu0 %988
      %990 = vrot.lane.b32.xlu0 %v987, 32
      %v991 = vpop.permute.xlu0 %990
      %994 = vst.msk [vmem:[%s298 + $0x8] sm:$0x1] %vm401, %v989
      %995 = vst.msk [vmem:[%s298 + $0x18] sm:$0x1] %vm401, %v991
      %v996 = vld [vmem:[%s278 + $0x9] sm:$0x1]
      %v997 = vld [vmem:[%s278 + $0x19] sm:$0x1]
      %v998 = vld [vmem:[%s278 + $0x29] sm:$0x1]
      %v999 = vld [vmem:[%s278 + $0x39] sm:$0x1]
      %v1004 = vrot.slane %v997, 7
      %v1005 = vsel %vm328, %v1004, %v996
      %v1006 = vrot.slane %v998, 6
      %v1007 = vsel %vm331, %v1006, %v1005
      %v1008 = vrot.slane %v999, 5
      %v1009 = vsel %vm334, %v1008, %v1007
      %v1010 = vsel %vm340, %v1009, 0
      %1012 = vmatpush.msra.mxu0 0.0
      %1013 = vmatpush.msra.mxu0 0.0
      %1014 = vmatpush.msra.mxu0 0.0
      %1015 = vmatpush.msra.mxu0 0.0
      %1016 = vmatpush.msra.mxu0 0.0
      %1017 = vmatpush.msra.mxu0 0.0
      %1018 = vmatpush.msra.mxu0 0.0
      %1019 = vmatpush.msra.mxu0 0.0
      %1020 = vmatpush.msra.mxu0 0.0
      %1021 = vmatpush.msra.mxu0 0.0
      %1022 = vmatpush.msra.mxu0 0.0
      %1023 = vmatpush.msra.mxu0 0.0
      %1024 = vmatpush.msra.mxu0 0.0
      %1025 = vmatpush.msra.mxu0 0.0
      %1026 = vmatpush.msra.mxu0 0.0
      %1027 = vmatpush.msra.mxu0 %v1010
      %1028 = vmatmul.f32.gmra.mxu0 %v338
      %v1029 = vpop.f32.mrf.mxu0
      %v1030 = vadd.f32 %v321, %v1029
      %1031 = vdwg.mxu0
      %v1033 = vsel %vm363, %v1030, 0
      %1035 = vmatpush.msra.mxu0 0.0
      %1036 = vmatpush.msra.mxu0 0.0
      %1037 = vmatpush.msra.mxu0 0.0
      %1038 = vmatpush.msra.mxu0 0.0
      %1039 = vmatpush.msra.mxu0 0.0
      %1040 = vmatpush.msra.mxu0 0.0
      %1041 = vmatpush.msra.mxu0 0.0
      %1042 = vmatpush.msra.mxu0 0.0
      %1043 = vmatpush.msra.mxu0 0.0
      %1044 = vmatpush.msra.mxu0 0.0
      %1045 = vmatpush.msra.mxu0 0.0
      %1046 = vmatpush.msra.mxu0 0.0
      %1047 = vmatpush.msra.mxu0 0.0
      %1048 = vmatpush.msra.mxu0 0.0
      %1049 = vmatpush.msra.mxu0 %v303
      %1050 = vmatpush.msra.mxu0 %v302
      %1051 = vmatmul.f32.gmra.mxu0 %v1033
      %v1052 = vpop.f32.mrf.mxu0
      %v1053 = vadd.f32 0.0, %v1052
      %1054 = vdwg.mxu0
      %v1056 = vrot.slane %v1053, 1
      %1058 = vst.msk [vmem:[%s298 + $0x9] sm:$0x1] %vm390, %v1053
      %1059 = vst.msk [vmem:[%s298 + $0x19] sm:$0x1] %vm390, %v1056
      %v1060 = vperm.slane %v1053, 0
      %v1061 = vperm.slane %v1056, 0
      %1062 = vrot.lane.b32.xlu0 %v1060, 32
      %v1063 = vpop.permute.xlu0 %1062
      %1064 = vrot.lane.b32.xlu0 %v1061, 32
      %v1065 = vpop.permute.xlu0 %1064
      %1068 = vst.msk [vmem:[%s298 + $0x9] sm:$0x1] %vm401, %v1063
      %1069 = vst.msk [vmem:[%s298 + $0x19] sm:$0x1] %vm401, %v1065
      %v1070 = vld [vmem:[%s278 + $0xa] sm:$0x1]
      %v1071 = vld [vmem:[%s278 + $0x1a] sm:$0x1]
      %v1072 = vld [vmem:[%s278 + $0x2a] sm:$0x1]
      %v1073 = vld [vmem:[%s278 + $0x3a] sm:$0x1]
      %v1078 = vrot.slane %v1071, 7
      %v1079 = vsel %vm328, %v1078, %v1070
      %v1080 = vrot.slane %v1072, 6
      %v1081 = vsel %vm331, %v1080, %v1079
      %v1082 = vrot.slane %v1073, 5
      %v1083 = vsel %vm334, %v1082, %v1081
      %v1084 = vsel %vm340, %v1083, 0
      %1086 = vmatpush.msra.mxu0 0.0
      %1087 = vmatpush.msra.mxu0 0.0
      %1088 = vmatpush.msra.mxu0 0.0
      %1089 = vmatpush.msra.mxu0 0.0
      %1090 = vmatpush.msra.mxu0 0.0
      %1091 = vmatpush.msra.mxu0 0.0
      %1092 = vmatpush.msra.mxu0 0.0
      %1093 = vmatpush.msra.mxu0 0.0
      %1094 = vmatpush.msra.mxu0 0.0
      %1095 = vmatpush.msra.mxu0 0.0
      %1096 = vmatpush.msra.mxu0 0.0
      %1097 = vmatpush.msra.mxu0 0.0
      %1098 = vmatpush.msra.mxu0 0.0
      %1099 = vmatpush.msra.mxu0 0.0
      %1100 = vmatpush.msra.mxu0 0.0
      %1101 = vmatpush.msra.mxu0 %v1084
      %1102 = vmatmul.f32.gmra.mxu0 %v338
      %v1103 = vpop.f32.mrf.mxu0
      %v1104 = vadd.f32 %v321, %v1103
      %1105 = vdwg.mxu0
      %v1107 = vsel %vm363, %v1104, 0
      %1109 = vmatpush.msra.mxu0 0.0
      %1110 = vmatpush.msra.mxu0 0.0
      %1111 = vmatpush.msra.mxu0 0.0
      %1112 = vmatpush.msra.mxu0 0.0
      %1113 = vmatpush.msra.mxu0 0.0
      %1114 = vmatpush.msra.mxu0 0.0
      %1115 = vmatpush.msra.mxu0 0.0
      %1116 = vmatpush.msra.mxu0 0.0
      %1117 = vmatpush.msra.mxu0 0.0
      %1118 = vmatpush.msra.mxu0 0.0
      %1119 = vmatpush.msra.mxu0 0.0
      %1120 = vmatpush.msra.mxu0 0.0
      %1121 = vmatpush.msra.mxu0 0.0
      %1122 = vmatpush.msra.mxu0 0.0
      %1123 = vmatpush.msra.mxu0 %v303
      %1124 = vmatpush.msra.mxu0 %v302
      %1125 = vmatmul.f32.gmra.mxu0 %v1107
      %v1126 = vpop.f32.mrf.mxu0
      %v1127 = vadd.f32 0.0, %v1126
      %1128 = vdwg.mxu0
      %v1130 = vrot.slane %v1127, 1
      %1132 = vst.msk [vmem:[%s298 + $0xa] sm:$0x1] %vm390, %v1127
      %1133 = vst.msk [vmem:[%s298 + $0x1a] sm:$0x1] %vm390, %v1130
      %v1134 = vperm.slane %v1127, 0
      %v1135 = vperm.slane %v1130, 0
      %1136 = vrot.lane.b32.xlu0 %v1134, 32
      %v1137 = vpop.permute.xlu0 %1136
      %1138 = vrot.lane.b32.xlu0 %v1135, 32
      %v1139 = vpop.permute.xlu0 %1138
      %1142 = vst.msk [vmem:[%s298 + $0xa] sm:$0x1] %vm401, %v1137
      %1143 = vst.msk [vmem:[%s298 + $0x1a] sm:$0x1] %vm401, %v1139
      %v1144 = vld [vmem:[%s278 + $0xb] sm:$0x1]
      %v1145 = vld [vmem:[%s278 + $0x1b] sm:$0x1]
      %v1146 = vld [vmem:[%s278 + $0x2b] sm:$0x1]
      %v1147 = vld [vmem:[%s278 + $0x3b] sm:$0x1]
      %v1152 = vrot.slane %v1145, 7
      %v1153 = vsel %vm328, %v1152, %v1144
      %v1154 = vrot.slane %v1146, 6
      %v1155 = vsel %vm331, %v1154, %v1153
      %v1156 = vrot.slane %v1147, 5
      %v1157 = vsel %vm334, %v1156, %v1155
      %v1158 = vsel %vm340, %v1157, 0
      %1160 = vmatpush.msra.mxu0 0.0
      %1161 = vmatpush.msra.mxu0 0.0
      %1162 = vmatpush.msra.mxu0 0.0
      %1163 = vmatpush.msra.mxu0 0.0
      %1164 = vmatpush.msra.mxu0 0.0
      %1165 = vmatpush.msra.mxu0 0.0
      %1166 = vmatpush.msra.mxu0 0.0
      %1167 = vmatpush.msra.mxu0 0.0
      %1168 = vmatpush.msra.mxu0 0.0
      %1169 = vmatpush.msra.mxu0 0.0
      %1170 = vmatpush.msra.mxu0 0.0
      %1171 = vmatpush.msra.mxu0 0.0
      %1172 = vmatpush.msra.mxu0 0.0
      %1173 = vmatpush.msra.mxu0 0.0
      %1174 = vmatpush.msra.mxu0 0.0
      %1175 = vmatpush.msra.mxu0 %v1158
      %1176 = vmatmul.f32.gmra.mxu0 %v338
      %v1177 = vpop.f32.mrf.mxu0
      %v1178 = vadd.f32 %v321, %v1177
      %1179 = vdwg.mxu0
      %v1181 = vsel %vm363, %v1178, 0
      %1183 = vmatpush.msra.mxu0 0.0
      %1184 = vmatpush.msra.mxu0 0.0
      %1185 = vmatpush.msra.mxu0 0.0
      %1186 = vmatpush.msra.mxu0 0.0
      %1187 = vmatpush.msra.mxu0 0.0
      %1188 = vmatpush.msra.mxu0 0.0
      %1189 = vmatpush.msra.mxu0 0.0
      %1190 = vmatpush.msra.mxu0 0.0
      %1191 = vmatpush.msra.mxu0 0.0
      %1192 = vmatpush.msra.mxu0 0.0
      %1193 = vmatpush.msra.mxu0 0.0
      %1194 = vmatpush.msra.mxu0 0.0
      %1195 = vmatpush.msra.mxu0 0.0
      %1196 = vmatpush.msra.mxu0 0.0
      %1197 = vmatpush.msra.mxu0 %v303
      %1198 = vmatpush.msra.mxu0 %v302
      %1199 = vmatmul.f32.gmra.mxu0 %v1181
      %v1200 = vpop.f32.mrf.mxu0
      %v1201 = vadd.f32 0.0, %v1200
      %1202 = vdwg.mxu0
      %v1204 = vrot.slane %v1201, 1
      %1206 = vst.msk [vmem:[%s298 + $0xb] sm:$0x1] %vm390, %v1201
      %1207 = vst.msk [vmem:[%s298 + $0x1b] sm:$0x1] %vm390, %v1204
      %v1208 = vperm.slane %v1201, 0
      %v1209 = vperm.slane %v1204, 0
      %1210 = vrot.lane.b32.xlu0 %v1208, 32
      %v1211 = vpop.permute.xlu0 %1210
      %1212 = vrot.lane.b32.xlu0 %v1209, 32
      %v1213 = vpop.permute.xlu0 %1212
      %1216 = vst.msk [vmem:[%s298 + $0xb] sm:$0x1] %vm401, %v1211
      %1217 = vst.msk [vmem:[%s298 + $0x1b] sm:$0x1] %vm401, %v1213
      %v1218 = vld [vmem:[%s278 + $0xc] sm:$0x1]
      %v1219 = vld [vmem:[%s278 + $0x1c] sm:$0x1]
      %v1220 = vld [vmem:[%s278 + $0x2c] sm:$0x1]
      %v1221 = vld [vmem:[%s278 + $0x3c] sm:$0x1]
      %v1226 = vrot.slane %v1219, 7
      %v1227 = vsel %vm328, %v1226, %v1218
      %v1228 = vrot.slane %v1220, 6
      %v1229 = vsel %vm331, %v1228, %v1227
      %v1230 = vrot.slane %v1221, 5
      %v1231 = vsel %vm334, %v1230, %v1229
      %v1232 = vsel %vm340, %v1231, 0
      %1234 = vmatpush.msra.mxu0 0.0
      %1235 = vmatpush.msra.mxu0 0.0
      %1236 = vmatpush.msra.mxu0 0.0
      %1237 = vmatpush.msra.mxu0 0.0
      %1238 = vmatpush.msra.mxu0 0.0
      %1239 = vmatpush.msra.mxu0 0.0
      %1240 = vmatpush.msra.mxu0 0.0
      %1241 = vmatpush.msra.mxu0 0.0
      %1242 = vmatpush.msra.mxu0 0.0
      %1243 = vmatpush.msra.mxu0 0.0
      %1244 = vmatpush.msra.mxu0 0.0
      %1245 = vmatpush.msra.mxu0 0.0
      %1246 = vmatpush.msra.mxu0 0.0
      %1247 = vmatpush.msra.mxu0 0.0
      %1248 = vmatpush.msra.mxu0 0.0
      %1249 = vmatpush.msra.mxu0 %v1232
      %1250 = vmatmul.f32.gmra.mxu0 %v338
      %v1251 = vpop.f32.mrf.mxu0
      %v1252 = vadd.f32 %v321, %v1251
      %1253 = vdwg.mxu0
      %v1255 = vsel %vm363, %v1252, 0
      %1257 = vmatpush.msra.mxu0 0.0
      %1258 = vmatpush.msra.mxu0 0.0
      %1259 = vmatpush.msra.mxu0 0.0
      %1260 = vmatpush.msra.mxu0 0.0
      %1261 = vmatpush.msra.mxu0 0.0
      %1262 = vmatpush.msra.mxu0 0.0
      %1263 = vmatpush.msra.mxu0 0.0
      %1264 = vmatpush.msra.mxu0 0.0
      %1265 = vmatpush.msra.mxu0 0.0
      %1266 = vmatpush.msra.mxu0 0.0
      %1267 = vmatpush.msra.mxu0 0.0
      %1268 = vmatpush.msra.mxu0 0.0
      %1269 = vmatpush.msra.mxu0 0.0
      %1270 = vmatpush.msra.mxu0 0.0
      %1271 = vmatpush.msra.mxu0 %v303
      %1272 = vmatpush.msra.mxu0 %v302
      %1273 = vmatmul.f32.gmra.mxu0 %v1255
      %v1274 = vpop.f32.mrf.mxu0
      %v1275 = vadd.f32 0.0, %v1274
      %1276 = vdwg.mxu0
      %v1278 = vrot.slane %v1275, 1
      %1280 = vst.msk [vmem:[%s298 + $0xc] sm:$0x1] %vm390, %v1275
      %1281 = vst.msk [vmem:[%s298 + $0x1c] sm:$0x1] %vm390, %v1278
      %v1282 = vperm.slane %v1275, 0
      %v1283 = vperm.slane %v1278, 0
      %1284 = vrot.lane.b32.xlu0 %v1282, 32
      %v1285 = vpop.permute.xlu0 %1284
      %1286 = vrot.lane.b32.xlu0 %v1283, 32
      %v1287 = vpop.permute.xlu0 %1286
      %1290 = vst.msk [vmem:[%s298 + $0xc] sm:$0x1] %vm401, %v1285
      %1291 = vst.msk [vmem:[%s298 + $0x1c] sm:$0x1] %vm401, %v1287
      %v1292 = vld [vmem:[%s278 + $0xd] sm:$0x1]
      %v1293 = vld [vmem:[%s278 + $0x1d] sm:$0x1]
      %v1294 = vld [vmem:[%s278 + $0x2d] sm:$0x1]
      %v1295 = vld [vmem:[%s278 + $0x3d] sm:$0x1]
      %v1300 = vrot.slane %v1293, 7
      %v1301 = vsel %vm328, %v1300, %v1292
      %v1302 = vrot.slane %v1294, 6
      %v1303 = vsel %vm331, %v1302, %v1301
      %v1304 = vrot.slane %v1295, 5
      %v1305 = vsel %vm334, %v1304, %v1303
      %v1306 = vsel %vm340, %v1305, 0
      %1308 = vmatpush.msra.mxu0 0.0
      %1309 = vmatpush.msra.mxu0 0.0
      %1310 = vmatpush.msra.mxu0 0.0
      %1311 = vmatpush.msra.mxu0 0.0
      %1312 = vmatpush.msra.mxu0 0.0
      %1313 = vmatpush.msra.mxu0 0.0
      %1314 = vmatpush.msra.mxu0 0.0
      %1315 = vmatpush.msra.mxu0 0.0
      %1316 = vmatpush.msra.mxu0 0.0
      %1317 = vmatpush.msra.mxu0 0.0
      %1318 = vmatpush.msra.mxu0 0.0
      %1319 = vmatpush.msra.mxu0 0.0
      %1320 = vmatpush.msra.mxu0 0.0
      %1321 = vmatpush.msra.mxu0 0.0
      %1322 = vmatpush.msra.mxu0 0.0
      %1323 = vmatpush.msra.mxu0 %v1306
      %1324 = vmatmul.f32.gmra.mxu0 %v338
      %v1325 = vpop.f32.mrf.mxu0
      %v1326 = vadd.f32 %v321, %v1325
      %1327 = vdwg.mxu0
      %v1329 = vsel %vm363, %v1326, 0
      %1331 = vmatpush.msra.mxu0 0.0
      %1332 = vmatpush.msra.mxu0 0.0
      %1333 = vmatpush.msra.mxu0 0.0
      %1334 = vmatpush.msra.mxu0 0.0
      %1335 = vmatpush.msra.mxu0 0.0
      %1336 = vmatpush.msra.mxu0 0.0
      %1337 = vmatpush.msra.mxu0 0.0
      %1338 = vmatpush.msra.mxu0 0.0
      %1339 = vmatpush.msra.mxu0 0.0
      %1340 = vmatpush.msra.mxu0 0.0
      %1341 = vmatpush.msra.mxu0 0.0
      %1342 = vmatpush.msra.mxu0 0.0
      %1343 = vmatpush.msra.mxu0 0.0
      %1344 = vmatpush.msra.mxu0 0.0
      %1345 = vmatpush.msra.mxu0 %v303
      %1346 = vmatpush.msra.mxu0 %v302
      %1347 = vmatmul.f32.gmra.mxu0 %v1329
      %v1348 = vpop.f32.mrf.mxu0
      %v1349 = vadd.f32 0.0, %v1348
      %1350 = vdwg.mxu0
      %v1352 = vrot.slane %v1349, 1
      %1354 = vst.msk [vmem:[%s298 + $0xd] sm:$0x1] %vm390, %v1349
      %1355 = vst.msk [vmem:[%s298 + $0x1d] sm:$0x1] %vm390, %v1352
      %v1356 = vperm.slane %v1349, 0
      %v1357 = vperm.slane %v1352, 0
      %1358 = vrot.lane.b32.xlu0 %v1356, 32
      %v1359 = vpop.permute.xlu0 %1358
      %1360 = vrot.lane.b32.xlu0 %v1357, 32
      %v1361 = vpop.permute.xlu0 %1360
      %1364 = vst.msk [vmem:[%s298 + $0xd] sm:$0x1] %vm401, %v1359
      %1365 = vst.msk [vmem:[%s298 + $0x1d] sm:$0x1] %vm401, %v1361
      %v1366 = vld [vmem:[%s278 + $0xe] sm:$0x1]
      %v1367 = vld [vmem:[%s278 + $0x1e] sm:$0x1]
      %v1368 = vld [vmem:[%s278 + $0x2e] sm:$0x1]
      %v1369 = vld [vmem:[%s278 + $0x3e] sm:$0x1]
      %v1374 = vrot.slane %v1367, 7
      %v1375 = vsel %vm328, %v1374, %v1366
      %v1376 = vrot.slane %v1368, 6
      %v1377 = vsel %vm331, %v1376, %v1375
      %v1378 = vrot.slane %v1369, 5
      %v1379 = vsel %vm334, %v1378, %v1377
      %v1380 = vsel %vm340, %v1379, 0
      %1382 = vmatpush.msra.mxu0 0.0
      %1383 = vmatpush.msra.mxu0 0.0
      %1384 = vmatpush.msra.mxu0 0.0
      %1385 = vmatpush.msra.mxu0 0.0
      %1386 = vmatpush.msra.mxu0 0.0
      %1387 = vmatpush.msra.mxu0 0.0
      %1388 = vmatpush.msra.mxu0 0.0
      %1389 = vmatpush.msra.mxu0 0.0
      %1390 = vmatpush.msra.mxu0 0.0
      %1391 = vmatpush.msra.mxu0 0.0
      %1392 = vmatpush.msra.mxu0 0.0
      %1393 = vmatpush.msra.mxu0 0.0
      %1394 = vmatpush.msra.mxu0 0.0
      %1395 = vmatpush.msra.mxu0 0.0
      %1396 = vmatpush.msra.mxu0 0.0
      %1397 = vmatpush.msra.mxu0 %v1380
      %1398 = vmatmul.f32.gmra.mxu0 %v338
      %v1399 = vpop.f32.mrf.mxu0
      %v1400 = vadd.f32 %v321, %v1399
      %1401 = vdwg.mxu0
      %v1403 = vsel %vm363, %v1400, 0
      %1405 = vmatpush.msra.mxu0 0.0
      %1406 = vmatpush.msra.mxu0 0.0
      %1407 = vmatpush.msra.mxu0 0.0
      %1408 = vmatpush.msra.mxu0 0.0
      %1409 = vmatpush.msra.mxu0 0.0
      %1410 = vmatpush.msra.mxu0 0.0
      %1411 = vmatpush.msra.mxu0 0.0
      %1412 = vmatpush.msra.mxu0 0.0
      %1413 = vmatpush.msra.mxu0 0.0
      %1414 = vmatpush.msra.mxu0 0.0
      %1415 = vmatpush.msra.mxu0 0.0
      %1416 = vmatpush.msra.mxu0 0.0
      %1417 = vmatpush.msra.mxu0 0.0
      %1418 = vmatpush.msra.mxu0 0.0
      %1419 = vmatpush.msra.mxu0 %v303
      %1420 = vmatpush.msra.mxu0 %v302
      %1421 = vmatmul.f32.gmra.mxu0 %v1403
      %v1422 = vpop.f32.mrf.mxu0
      %v1423 = vadd.f32 0.0, %v1422
      %1424 = vdwg.mxu0
      %v1426 = vrot.slane %v1423, 1
      %1428 = vst.msk [vmem:[%s298 + $0xe] sm:$0x1] %vm390, %v1423
      %1429 = vst.msk [vmem:[%s298 + $0x1e] sm:$0x1] %vm390, %v1426
      %v1430 = vperm.slane %v1423, 0
      %v1431 = vperm.slane %v1426, 0
      %1432 = vrot.lane.b32.xlu0 %v1430, 32
      %v1433 = vpop.permute.xlu0 %1432
      %1434 = vrot.lane.b32.xlu0 %v1431, 32
      %v1435 = vpop.permute.xlu0 %1434
      %1438 = vst.msk [vmem:[%s298 + $0xe] sm:$0x1] %vm401, %v1433
      %1439 = vst.msk [vmem:[%s298 + $0x1e] sm:$0x1] %vm401, %v1435
      %v1440 = vld [vmem:[%s278 + $0xf] sm:$0x1]
      %v1441 = vld [vmem:[%s278 + $0x1f] sm:$0x1]
      %v1442 = vld [vmem:[%s278 + $0x2f] sm:$0x1]
      %v1443 = vld [vmem:[%s278 + $0x3f] sm:$0x1]
      %v1448 = vrot.slane %v1441, 7
      %v1449 = vsel %vm328, %v1448, %v1440
      %v1450 = vrot.slane %v1442, 6
      %v1451 = vsel %vm331, %v1450, %v1449
      %v1452 = vrot.slane %v1443, 5
      %v1453 = vsel %vm334, %v1452, %v1451
      %v1454 = vsel %vm340, %v1453, 0
      %1456 = vmatpush.msra.mxu0 0.0
      %1457 = vmatpush.msra.mxu0 0.0
      %1458 = vmatpush.msra.mxu0 0.0
      %1459 = vmatpush.msra.mxu0 0.0
      %1460 = vmatpush.msra.mxu0 0.0
      %1461 = vmatpush.msra.mxu0 0.0
      %1462 = vmatpush.msra.mxu0 0.0
      %1463 = vmatpush.msra.mxu0 0.0
      %1464 = vmatpush.msra.mxu0 0.0
      %1465 = vmatpush.msra.mxu0 0.0
      %1466 = vmatpush.msra.mxu0 0.0
      %1467 = vmatpush.msra.mxu0 0.0
      %1468 = vmatpush.msra.mxu0 0.0
      %1469 = vmatpush.msra.mxu0 0.0
      %1470 = vmatpush.msra.mxu0 0.0
      %1471 = vmatpush.msra.mxu0 %v1454
      %1472 = vmatmul.f32.gmra.mxu0 %v338
      %v1473 = vpop.f32.mrf.mxu0
      %v1474 = vadd.f32 %v321, %v1473
      %1475 = vdwg.mxu0
      %v1477 = vsel %vm363, %v1474, 0
      %1479 = vmatpush.msra.mxu0 0.0
      %1480 = vmatpush.msra.mxu0 0.0
      %1481 = vmatpush.msra.mxu0 0.0
      %1482 = vmatpush.msra.mxu0 0.0
      %1483 = vmatpush.msra.mxu0 0.0
      %1484 = vmatpush.msra.mxu0 0.0
      %1485 = vmatpush.msra.mxu0 0.0
      %1486 = vmatpush.msra.mxu0 0.0
      %1487 = vmatpush.msra.mxu0 0.0
      %1488 = vmatpush.msra.mxu0 0.0
      %1489 = vmatpush.msra.mxu0 0.0
      %1490 = vmatpush.msra.mxu0 0.0
      %1491 = vmatpush.msra.mxu0 0.0
      %1492 = vmatpush.msra.mxu0 0.0
      %1493 = vmatpush.msra.mxu0 %v303
      %1494 = vmatpush.msra.mxu0 %v302
      %1495 = vmatmul.f32.gmra.mxu0 %v1477
      %v1496 = vpop.f32.mrf.mxu0
      %v1497 = vadd.f32 0.0, %v1496
      %1498 = vdwg.mxu0
      %v1500 = vrot.slane %v1497, 1
      %1502 = vst.msk [vmem:[%s298 + $0xf] sm:$0x1] %vm390, %v1497
      %1503 = vst.msk [vmem:[%s298 + $0x1f] sm:$0x1] %vm390, %v1500
      %v1504 = vperm.slane %v1497, 0
      %v1505 = vperm.slane %v1500, 0
      %1506 = vrot.lane.b32.xlu0 %v1504, 32
      %v1507 = vpop.permute.xlu0 %1506
      %1508 = vrot.lane.b32.xlu0 %v1505, 32
      %v1509 = vpop.permute.xlu0 %1508
      %1512 = vst.msk [vmem:[%s298 + $0xf] sm:$0x1] %vm401, %v1507
      %1513 = vst.msk [vmem:[%s298 + $0x1f] sm:$0x1] %vm401, %v1509
      %s1514 = smul.u32 2, %s21
      %p1515 = scmp.lt.s32.totalorder %s20, 1
      %s1516 = scalar_select %p1515, %s20, 1
      %p1517 = scmp.lt.s32.totalorder %s1514, 1
      %s1518 = scalar_select %p1517, %s1514, 1
      %s1519 = smul.addr %s1516, 8
      %s1520 = sadd.s32 %s1518, %s1519
      %s1521 = smul.addr %s1520, 8
      %s1522 = scalar_lea.vmem %s5, %s1521
      // Predicated region
      $region41: #{upsampling_forward.1} parent=39 // pred_check
        %p1523 = pneg %p167
      $region42: #{upsampling_forward.1} parent=39 // pred_check_branch
        %1525 = sbr.rel (%p1523) target = $region44
      $region43: #{upsampling_forward.1} parent=39 // pred_region
        %s1526 = smul.u32 2, %s21
      $region44: #{upsampling_forward.1} parent=39 // pred_fallthru
        _
    $region40: #{upsampling_forward.1} parent=5 // pred_fallthru
      _
    %p1527 = scmp.le.s32.totalorder 2, %s11
    // Predicated region
    $region45: #{upsampling_forward.1} parent=5 // pred_check
      %p1528 = pneg %p1527
    $region46: #{upsampling_forward.1} parent=5 // pred_check_branch
      %1530 = sbr.rel (%p1528) target = $region48
    $region47: #{upsampling_forward.1} parent=5 // pred_region
      %s1531 = ssub.s32 %s11, 2
      // Predicated region
      $region49: #{upsampling_forward.1} parent=47 // pred_check
        %p1532 = pneg %p173
      $region50: #{upsampling_forward.1} parent=47 // pred_check_branch
        %1534 = sbr.rel (%p1532) target = $region52
      $region51: #{upsampling_forward.1} parent=47 // pred_region
        %s1535 = smul.u32 2, %s23
        %p1536 = scmp.lt.s32.totalorder %s22, 1
        %s1537 = scalar_select %p1536, %s22, 1
        %p1538 = scmp.lt.s32.totalorder %s1535, 1
        %s1539 = scalar_select %p1538, %s1535, 1
        %s1540 = smul.addr %s1537, 8
        %s1541 = sadd.s32 %s1539, %s1540
        %s1542 = smul.addr %s1541, 8
        %s1543 = scalar_lea.vmem %s5, %s1542
      $region52: #{upsampling_forward.1} parent=47 // pred_fallthru
        _
    $region48: #{upsampling_forward.1} parent=5 // pred_fallthru
      _
  $region6: #{upsampling_forward.1} parent=0 // loop_footer
    %s15 = sadd.s32 1, %s11
  $region7: #{upsampling_forward.1} parent=0 // loop_footer_branch
    %10 = sbr.rel target = $region3
  $region8: #{upsampling_forward.1} parent=0 // loop_exit
    _

</llo_original>
